<compile_context>
chip_gen: v7x
topology: tpu7x:2x2x1
jax: 0.10.0
libtpu: 0.0.40
codegen_flags: <defaults>
</compile_context>

<pallas_src>
import numpy as np
import jax
import jax.numpy as jnp
from jax import lax
from jax.experimental import pallas as pl
from jax.experimental.pallas import tpu as pltpu

# ----------------------------- config (small synthetic shapes) -----------------------------
B = 2                  # image batch
IMG_C, IMG_H, IMG_W = 4, 16, 16
N_CLS = 4              # number of classes
N_PROMPT = 8           # cfg.TRAINER.PRODA.N_PROMPT   (prompt_bsz == n_prompt -> n_iter == 1)
N_CTX = 4              # cfg.TRAINER.PRODA.N_CTX
CTX_DIM = 128          # clip_model.ln_final.weight.shape[0]  (lane-dense)
SEQ_LEN = 16           # tokenized prompt length
EMBED_DIM = 128        # joint embedding dim                  (lane-dense)
ALPHA = 0.1            # cfg.TRAINER.PRODA.ALPHA
NAME_LENS = [1, 2, 1, 2]


def _vmem():
    return pl.BlockSpec(memory_space=pltpu.MemorySpace.VMEM)


def _smem():
    return pl.BlockSpec(memory_space=pltpu.MemorySpace.SMEM)


# ------------------------------ in-kernel building blocks -----------------------------------
def _l2_normalize(x):
    # rsqrt -> EUP slot (otherwise idle); tiny eps guards a zero row.
    return x * lax.rsqrt(jnp.sum(x * x, axis=-1, keepdims=True) + 1e-12)


def _encode_image(x_ref, w_ref):
    # synthetic image encoder: linear projection (bf16 MXU operands pre-cast in wrapper,
    # f32 accumulation) + L2 normalization
    feats = jnp.dot(x_ref[...], w_ref[...], preferred_element_type=jnp.float32)
    return _l2_normalize(feats)


def _encode_text(eot_ref, lnw_ref, lnb_ref, proj_ref):
    # eot_ref: (N, ctx_dim) EOT tokens (prompt token + positional embedding, gathered in glue)
    # TODO(synk): clip_model.transformer blocks omitted (external pretrained submodule);
    #             text encoder here = positional embedding + ln_final + text_projection.
    x = eot_ref[...]
    mu = jnp.mean(x, axis=-1, keepdims=True)
    var = jnp.mean((x - mu) ** 2, axis=-1, keepdims=True)
    xn = (x - mu) * lax.rsqrt(var + 1e-5)                   # LN in f32 (precision matters here)
    xn = xn * lnw_ref[...] + lnb_ref[...]
    return jnp.dot(xn.astype(jnp.bfloat16), proj_ref[...],  # proj already bf16 (wrapper pre-cast)
                   preferred_element_type=jnp.float32)


# ----------------------------------- fused kernels ------------------------------------------
def make_train_kernel(n_cls, n_prompt, batch, alpha):
    def kernel(lbl_ref, ls_ref, x_ref, w_ref, eot_ref, lnw_ref, lnb_ref, proj_ref, loss_ref):
        d = proj_ref.shape[-1]
        scale = ls_ref[0]                                   # exp(logit_scale), SMEM scalar read

        img = _encode_image(x_ref, w_ref)                   # (B, D), L2-normalized, f32
        # one text-encoder pass + one normalization for class prompts AND class-agnostic prompts
        feats = _l2_normalize(_encode_text(eot_ref, lnw_ref, lnb_ref, proj_ref))   # (C*P+P, D)
        txt = feats[:n_cls * n_prompt]                      # (C*P, D)  split aligned to sublane
        nc = feats[n_cls * n_prompt:]                       # (P, D)

        # per-class prompt mean + centering: (C, P, D) batched ops (no slice/concat loops)
        txt3 = txt.reshape(n_cls, n_prompt, d)
        tmean = jnp.mean(txt3, axis=1)                      # (C, D)
        centered = txt3 - tmean[:, None, :]                 # (C, P, D), f32
        flat = centered.reshape(n_cls, n_prompt * d)        # (C, P*D)

        # logits = logit_scale * image_features @ text_mean.T  (bf16 MXU, f32 acc)
        logits = scale * lax.dot_general(
            img.astype(jnp.bfloat16), tmean.astype(jnp.bfloat16),
            (((1,), (1,)), ((), ())), preferred_element_type=jnp.float32)          # (B, C)

        # sigma term.  refined[b,i,k] = sum_{p,d} centered[i,p,d] * img[b,d]^2 * centered[k,p,d]
        # restructured as ONE f32 MXU matmul per batch row: (C, P*D) x (P*D, C), contraction
        # over P*D on the MXU (no (C,C,D)/(B,C,C,D) broadcast intermediates).  Kept in f32:
        # 0.5*scale^2 (~204) amplifies any bf16 error on this path.
        img2 = img * img                                                           # (B, D)
        row_iota = lax.broadcasted_iota(jnp.int32, (1, n_cls), 1)
        col_iota = lax.broadcasted_iota(jnp.int32, (n_cls, 1), 0)
        eye = (lax.broadcasted_iota(jnp.int32, (n_cls, n_cls), 0)
               == lax.broadcasted_iota(jnp.int32, (n_cls, n_cls), 1)).astype(jnp.float32)
        inv_pp1 = 1.0 / float(n_prompt + 1)

        sigma_rows, oh_rows = [], []
        for b in range(batch):          # static unroll (tiny B); becomes a grid axis at scale
            lbl_b = lbl_ref[b]                                              # SMEM scalar int32
            oh_row = (row_iota == lbl_b).astype(jnp.float32)                # (1, C)
            oh_col = (col_iota == lbl_b).astype(jnp.float32)                # (C, 1)
            w_b = img2[b:b + 1, :].reshape(1, 1, d)                         # (1, 1, D)
            a_flat = (centered * w_b).reshape(n_cls, n_prompt * d)          # (C, P*D)
            refined_b = lax.dot_general(
                a_flat, flat, (((1,), (1,)), ((), ())),
                preferred_element_type=jnp.float32) * inv_pp1               # (C, C)
            diag_b = jnp.sum(refined_b * eye, axis=0, keepdims=True)        # (1, C) refined[k,k]
            row_l = jnp.sum(refined_b * oh_col, axis=0, keepdims=True)      # (1, C) refined[l,k]
            r_ll = jnp.sum(row_l * oh_row, axis=1, keepdims=True)           # (1, 1) refined[l,l]
            sigma_rows.append(r_ll + diag_b - 2.0 * row_l)                  # (1, C)
            oh_rows.append(oh_row)
        sigma = jnp.concatenate(sigma_rows, axis=0)                         # (B, C)
        onehot = jnp.concatenate(oh_rows, axis=0)                           # (B, C)

        logits = logits + 0.5 * scale * scale * sigma

        # cross entropy (mean reduction)
        m = jnp.max(logits, axis=1, keepdims=True)
        lse = m + jnp.log(jnp.sum(jnp.exp(logits - m), axis=1, keepdims=True))     # (B, 1)
        tgt = jnp.sum(onehot * logits, axis=1, keepdims=True)                      # (B, 1)
        loss_upper = jnp.sum(lse - tgt, axis=0, keepdims=True) * (1.0 / batch)     # (1, 1)

        # prompt-diversity regularizer on class-agnostic prompts (tiny matmul -> keep f32,
        # no bf16 cast overhead)
        dis = lax.dot_general(nc, nc, (((1,), (1,)), ((), ())),
                              preferred_element_type=jnp.float32)           # (P, P)
        pi = lax.broadcasted_iota(jnp.int32, (n_prompt, n_prompt), 0)
        pj = lax.broadcasted_iota(jnp.int32, (n_prompt, n_prompt), 1)
        off = (pi != pj).astype(jnp.float32)
        n_off = float(n_prompt * n_prompt - n_prompt)
        loss_m = jnp.sum(jnp.sum(jnp.abs(dis) * off, axis=1, keepdims=True),
                         axis=0, keepdims=True) * (1.0 / n_off)             # (1, 1)

        # (1,1) VMEM output: a single 4-byte masked store; negligible vs the fusion win.
        loss_ref[...] = loss_upper + alpha * loss_m
    return kernel


def make_infer_kernel(n_cls, n_prompt):
    def kernel(ls_ref, x_ref, w_ref, eot_ref, lnw_ref, lnb_ref, proj_ref,
               logits_ref, imgf_ref, txtf_ref):
        d = proj_ref.shape[-1]
        scale = ls_ref[0]
        img = _encode_image(x_ref, w_ref)                                   # (B, D)
        # set_classifier(): encode, normalize, view (C, P, D), mean over prompts
        txt = _l2_normalize(_encode_text(eot_ref, lnw_ref, lnb_ref, proj_ref))     # (C*P, D)
        tmean = jnp.mean(txt.reshape(n_cls, n_prompt, d), axis=1)           # (C, D)
        logits_ref[...] = scale * lax.dot_general(
            img.astype(jnp.bfloat16), tmean.astype(jnp.bfloat16),
            (((1,), (1,)), ((), ())), preferred_element_type=jnp.float32)
        imgf_ref[...] = img
        txtf_ref[...] = tmean
    return kernel


# ------------------------------------- wrappers ---------------------------------------------
_COMPILER_PARAMS = pltpu.CompilerParams(vmem_limit_bytes=32 * 1024 * 1024)


def proda_forward_train(image, label, eot_txt, eot_nc, params):
    """Training forward: returns the scalar ProDA loss (single fused pallas_call)."""
    x = image.reshape(image.shape[0], -1).astype(jnp.bfloat16)          # halve activation DMA
    eot_all = jnp.concatenate([eot_txt, eot_nc], axis=0)                # (C*P + P, ctx_dim)
    w_bf16 = params['w_img'].astype(jnp.bfloat16)                       # halve weight DMA bytes
    proj_bf16 = params['text_proj'].astype(jnp.bfloat16)
    scale = jnp.exp(params['logit_scale']).reshape(1).astype(jnp.float32)   # SMEM scalar
    lbl = label.astype(jnp.int32)                                           # SMEM int32
    kernel = make_train_kernel(N_CLS, N_PROMPT, x.shape[0], ALPHA)
    loss = pl.pallas_call(
        kernel,
        out_shape=jax.ShapeDtypeStruct((1, 1), jnp.float32),
        in_specs=[_smem(), _smem()] + [_vmem()] * 6,
        out_specs=_vmem(),
        compiler_params=_COMPILER_PARAMS,
    )(lbl, scale, x, w_bf16, eot_all, params['ln_w'], params['ln_b'], proj_bf16)
    return loss[0, 0]


def proda_forward_infer(image, eot_txt, params):
    """Inference forward: set_classifier() + eval logits fused; returns (logits, img_feat, text_feat)."""
    x = image.reshape(image.shape[0], -1).astype(jnp.bfloat16)
    w_bf16 = params['w_img'].astype(jnp.bfloat16)
    proj_bf16 = params['text_proj'].astype(jnp.bfloat16)
    scale = jnp.exp(params['logit_scale']).reshape(1).astype(jnp.float32)
    kernel = make_infer_kernel(N_CLS, N_PROMPT)
    return pl.pallas_call(
        kernel,
        out_shape=(jax.ShapeDtypeStruct((x.shape[0], N_CLS), jnp.float32),
                   jax.ShapeDtypeStruct((x.shape[0], EMBED_DIM), jnp.float32),
                   jax.ShapeDtypeStruct((N_CLS, EMBED_DIM), jnp.float32)),
        in_specs=[_smem()] + [_vmem()] * 6,
        out_specs=[_vmem()] * 3,
        compiler_params=_COMPILER_PARAMS,
    )(scale, x, w_bf16, eot_txt, params['ln_w'], params['ln_b'], proj_bf16)


# ------------------------- PromptLearner forward (pure glue: concat/repeat) ------------------
def build_prompts(ctx, pos, token_prefix, token_suffix, nc_token_prefix, nc_token_suffix,
                  name_lens, n_ctx):
    n_prompt, _, ctx_dim = ctx.shape
    n_cls = token_prefix.shape[0]
    pos = np.asarray(pos)
    idx_end, idx_mid, idx_front = np.where(pos == 2)[0], np.where(pos == 1)[0], np.where(pos == 0)[0]
    n_end, n_mid, n_front = len(idx_end), len(idx_mid), len(idx_front)
    ctx_end, ctx_mid, ctx_front = ctx[idx_end], ctx[idx_mid], ctx[idx_front]

    # pos == 2 : [SOT][ctx][name . EOT pad]
    prefix = jnp.broadcast_to(token_prefix[:, None], (n_cls, n_end) + token_prefix.shape[1:])
    suffix = jnp.broadcast_to(token_suffix[:, None], (n_cls, n_end) + token_suffix.shape[1:])
    ce = jnp.broadcast_to(ctx_end[None], (n_cls,) + ctx_end.shape)
    prompts_end = jnp.concatenate([prefix, ce, suffix], axis=2)

    half = n_ctx // 2
    mid_rows, front_rows = [], []
    for i in range(n_cls):
        nl = name_lens[i]
        pre_i = jnp.broadcast_to(token_prefix[i:i + 1][:, None], (1, n_mid, 1, ctx_dim))
        cls_i = jnp.broadcast_to(token_suffix[i:i + 1, :nl][:, None], (1, n_mid, nl, ctx_dim))
        suf_i = jnp.broadcast_to(token_suffix[i:i + 1, nl:][:, None],
                                 (1, n_mid, token_suffix.shape[1] - nl, ctx_dim))
        c1, c2 = ctx_mid[None, :, :half], ctx_mid[None, :, half:]
        mid_rows.append(jnp.concatenate([pre_i, c1, cls_i, c2, suf_i], axis=2))

        pre_i = jnp.broadcast_to(token_prefix[i:i + 1][:, None], (1, n_front, 1, ctx_dim))
        cls_i = jnp.broadcast_to(token_suffix[i:i + 1, :nl][:, None], (1, n_front, nl, ctx_dim))
        suf_i = jnp.broadcast_to(token_suffix[i:i + 1, nl:][:, None],
                                 (1, n_front, token_suffix.shape[1] - nl, ctx_dim))
        cf = ctx_front[None]
        front_rows.append(jnp.concatenate([pre_i, cls_i, cf, suf_i], axis=2))

    prompts_middle = jnp.concatenate(mid_rows, axis=0)
    prompts_front = jnp.concatenate(front_rows, axis=0)
    prompts = jnp.concatenate([prompts_end, prompts_middle, prompts_front], axis=1)
    seq_len = prompts.shape[2]
    prompts = prompts.reshape(n_prompt * n_cls, seq_len, ctx_dim)

    # EOT (argmax of tokenized prompts): SOT + n_ctx ctx tokens + name tokens + '.' -> EOT
    eot_cls = np.array([2 + n_ctx + nl for nl in name_lens], dtype=np.int32)
    eot_idx = jnp.asarray(np.repeat(eot_cls, n_prompt))

    # class-agnostic prompts: [SOT][ctx][. EOT pad]
    nc_prompts = jnp.concatenate([
        jnp.broadcast_to(nc_token_prefix, (n_prompt,) + nc_token_prefix.shape[1:]),
        ctx,
        jnp.broadcast_to(nc_token_suffix, (n_prompt,) + nc_token_suffix.shape[1:]),
    ], axis=1)
    nc_eot = jnp.full((n_prompt,), 2 + n_ctx, dtype=jnp.int32)
    return prompts, eot_idx, nc_prompts, nc_eot


def gather_eot(prompts, eot_idx, pos_emb):
    # EOT-token gather + positional embedding (static indices; glue feeding the fused kernel).
    n = prompts.shape[0]
    return prompts[jnp.arange(n), eot_idx, :] + pos_emb[eot_idx, :]


# ------------------------------ pure-JAX reference (sanity check) ----------------------------
def reference_forward(image, label, prompts, eot_idx, nc_prompts, nc_eot, p):
    # Mirrors the kernel's bf16-MXU / f32-accumulate numerics so the check is tight.
    bf16 = jnp.bfloat16
    x = image.reshape(image.shape[0], -1)
    img = jnp.dot(x.astype(bf16), p['w_img'].astype(bf16), preferred_element_type=jnp.float32)
    img = img / jnp.sqrt(jnp.sum(img * img, -1, keepdims=True) + 1e-12)

    def tenc(pr, e):
        n = pr.shape[0]
        t = pr[jnp.arange(n), e, :] + p['pos_emb'][e, :]
        mu = t.mean(-1, keepdims=True)
        var = ((t - mu) ** 2).mean(-1, keepdims=True)
        tn = (t - mu) / jnp.sqrt(var + 1e-5) * p['ln_w'] + p['ln_b']
        return jnp.dot(tn.astype(bf16), p['text_proj'].astype(bf16),
                       preferred_element_type=jnp.float32)

    tf = tenc(prompts, eot_idx)
    nc = tenc(nc_prompts, nc_eot)
    tf = tf / jnp.sqrt(jnp.sum(tf * tf, -1, keepdims=True) + 1e-12)
    tf3 = tf.reshape(N_CLS, N_PROMPT, -1)
    tmean = tf3.mean(axis=1)
    scale = jnp.exp(p['logit_scale'][0, 0])
    logits = scale * jnp.dot(img.astype(bf16), tmean.T.astype(bf16),
                             preferred_element_type=jnp.float32)
    centered = tf3 - tmean[:, None, :]
    diag_cov = jnp.einsum('ipd,kpd->dik', centered, centered) / (N_PROMPT + 1)
    refined = jnp.einsum('bd,dik->bik', img ** 2, diag_cov)
    b = jnp.arange(image.shape[0])
    sigma = (refined[b, label, label][:, None]
             + refined[:, jnp.arange(N_CLS), jnp.arange(N_CLS)]
             - 2.0 * refined[b, label, :])
    train_logits = logits + 0.5 * scale ** 2 * sigma
    lse = jax.scipy.special.logsumexp(train_logits, axis=1)
    loss_upper = jnp.mean(lse - train_logits[b, label])
    nc = nc / jnp.sqrt(jnp.sum(nc * nc, -1, keepdims=True) + 1e-12)
    dis = jnp.dot(nc, nc.T)                                  # f32 (matches kernel)
    mask = 1.0 - jnp.eye(N_PROMPT)
    loss_m = jnp.sum(jnp.abs(dis) * mask) / (N_PROMPT * N_PROMPT - N_PROMPT)
    loss = loss_upper + ALPHA * loss_m
    eval_logits = scale * jnp.dot(img.astype(bf16), tmean.T.astype(bf16),
                                  preferred_element_type=jnp.float32)
    return loss, eval_logits, img, tmean


# --------------------------------------------- main ------------------------------------------
if __name__ == "__main__":
    key = jax.random.PRNGKey(0)
    ks = jax.random.split(key, 10)

    image = jax.random.normal(ks[0], (B, IMG_C, IMG_H, IMG_W), jnp.float32)
    label = jnp.array([0, 1], dtype=jnp.int32)

    params = dict(
        w_img=0.02 * jax.random.normal(ks[1], (IMG_C * IMG_H * IMG_W, EMBED_DIM), jnp.float32),
        ctx=0.02 * jax.random.normal(ks[2], (N_PROMPT, N_CTX, CTX_DIM), jnp.float32),
        token_prefix=0.02 * jax.random.normal(ks[3], (N_CLS, 1, CTX_DIM), jnp.float32),
        token_suffix=0.02 * jax.random.normal(ks[4], (N_CLS, SEQ_LEN - 1 - N_CTX, CTX_DIM), jnp.float32),
        nc_token_prefix=0.02 * jax.random.normal(ks[5], (1, 1, CTX_DIM), jnp.float32),
        nc_token_suffix=0.02 * jax.random.normal(ks[6], (1, SEQ_LEN - 1 - N_CTX, CTX_DIM), jnp.float32),
        pos_emb=0.01 * jax.random.normal(ks[7], (SEQ_LEN, CTX_DIM), jnp.float32),
        ln_w=jnp.ones((1, CTX_DIM), jnp.float32),
        ln_b=jnp.zeros((1, CTX_DIM), jnp.float32),
        text_proj=(CTX_DIM ** -0.5) * jax.random.normal(ks[8], (CTX_DIM, EMBED_DIM), jnp.float32),
        logit_scale=jnp.full((1, 1), float(np.log(1.0 / 0.07)), jnp.float32),
    )

    # pos layout from PromptLearner.__init__ (n_prompt > 1)
    pos = [0] * (N_PROMPT // 4) + [1] * (N_PROMPT // 4) + [2] * (N_PROMPT // 2)
    prompts, eot_idx, nc_prompts, nc_eot = build_prompts(
        params['ctx'], pos, params['token_prefix'], params['token_suffix'],
        params['nc_token_prefix'], params['nc_token_suffix'], NAME_LENS, N_CTX)
    eot_txt = gather_eot(prompts, eot_idx, params['pos_emb'])       # (N_CLS*N_PROMPT, CTX_DIM)
    eot_nc = gather_eot(nc_prompts, nc_eot, params['pos_emb'])      # (N_PROMPT, CTX_DIM)

    # ---- training forward: single fused kernel -> scalar loss ----
    loss = proda_forward_train(image, label, eot_txt, eot_nc, params)
    loss = jax.block_until_ready(loss)

    # ---- inference path: set_classifier() + eval logits fused into one kernel ----
    logits, img_feat, text_features = proda_forward_infer(image, eot_txt, params)
    logits = jax.block_until_ready(logits)

    # sanity check against a pure-JAX reference of the same math (same bf16-MXU numerics)
    ref_loss, ref_logits, ref_img, ref_tmean = reference_forward(
        image, label, prompts, eot_idx, nc_prompts, nc_eot, params)
    assert np.isfinite(float(loss))
    np.testing.assert_allclose(float(loss), float(ref_loss), rtol=2e-2, atol=2e-2)
    np.testing.assert_allclose(np.asarray(logits), np.asarray(ref_logits), rtol=2e-2, atol=2e-2)
    np.testing.assert_allclose(np.asarray(img_feat), np.asarray(ref_img), rtol=2e-2, atol=2e-2)
    np.testing.assert_allclose(np.asarray(text_features), np.asarray(ref_tmean), rtol=2e-2, atol=2e-2)

    print("KERNEL_OK")
</pallas_src>

<mosaic_0001>
module attributes {stable_mosaic.version = 11 : i64} {
  func.func @kernel(%arg0: memref<2xi32, #tpu.memory_space<smem>>, %arg1: memref<1xf32, #tpu.memory_space<smem>>, %arg2: memref<2x1024xbf16, #tpu.memory_space<vmem>>, %arg3: memref<1024x128xbf16, #tpu.memory_space<vmem>>, %arg4: memref<40x128xf32, #tpu.memory_space<vmem>>, %arg5: memref<1x128xf32, #tpu.memory_space<vmem>>, %arg6: memref<1x128xf32, #tpu.memory_space<vmem>>, %arg7: memref<128x128xbf16, #tpu.memory_space<vmem>>, %arg8: memref<1x1xf32, #tpu.memory_space<vmem>>) attributes {dimension_semantics = [], scalar_prefetch = 0 : i64, scratch_operands = 0 : i64, tpu.core_type = #tpu.core_type<tc>} {
    %c0 = arith.constant 0 : index
    %0 = memref.load %arg1[%c0] : memref<1xf32, #tpu.memory_space<smem>>
    %c0_0 = arith.constant 0 : index
    %c0_1 = arith.constant 0 : index
    %1 = vector.load %arg2[%c0_0, %c0_1] : memref<2x1024xbf16, #tpu.memory_space<vmem>>, vector<2x1024xbf16>
    %c0_2 = arith.constant 0 : index
    %c0_3 = arith.constant 0 : index
    %2 = vector.load %arg3[%c0_2, %c0_3] : memref<1024x128xbf16, #tpu.memory_space<vmem>>, vector<1024x128xbf16>
    %cst = arith.constant dense<0.000000e+00> : vector<2x128xf32>
    %3 = tpu.matmul %1, %2, %cst {dimension_numbers = #tpu.dot_dimension_numbers<[1], [0], [0], [1], [0, 0, 1, 1], [], []>} : vector<2x1024xbf16>, vector<1024x128xbf16>, vector<2x128xf32> -> vector<2x128xf32>
    %4 = arith.mulf %3, %3 : vector<2x128xf32>
    %cst_4 = arith.constant dense<0.000000e+00> : vector<2xf32>
    %5 = vector.multi_reduction <add>, %4, %cst_4 [1] : vector<2x128xf32> to vector<2xf32>
    %6 = vector.shape_cast %5 : vector<2xf32> to vector<2x1xf32>
    %cst_5 = arith.constant 9.99999996E-13 : f32
    %7 = vector.broadcast %cst_5 : f32 to vector<2x1xf32>
    %8 = arith.addf %6, %7 : vector<2x1xf32>
    %9 = math.rsqrt %8 : vector<2x1xf32>
    %10 = vector.broadcast %9 : vector<2x1xf32> to vector<2x128xf32>
    %11 = arith.mulf %3, %10 : vector<2x128xf32>
    %c0_6 = arith.constant 0 : index
    %c0_7 = arith.constant 0 : index
    %12 = vector.load %arg4[%c0_6, %c0_7] : memref<40x128xf32, #tpu.memory_space<vmem>>, vector<40x128xf32>
    %cst_8 = arith.constant dense<0.000000e+00> : vector<40xf32>
    %13 = vector.multi_reduction <add>, %12, %cst_8 [1] : vector<40x128xf32> to vector<40xf32>
    %14 = vector.shape_cast %13 : vector<40xf32> to vector<40x1xf32>
    %cst_9 = arith.constant 1.280000e+02 : f32
    %15 = vector.broadcast %cst_9 : f32 to vector<40x1xf32>
    %16 = arith.divf %14, %15 : vector<40x1xf32>
    %17 = vector.broadcast %16 : vector<40x1xf32> to vector<40x128xf32>
    %18 = arith.subf %12, %17 : vector<40x128xf32>
    %19 = arith.mulf %18, %18 : vector<40x128xf32>
    %cst_10 = arith.constant dense<0.000000e+00> : vector<40xf32>
    %20 = vector.multi_reduction <add>, %19, %cst_10 [1] : vector<40x128xf32> to vector<40xf32>
    %21 = vector.shape_cast %20 : vector<40xf32> to vector<40x1xf32>
    %cst_11 = arith.constant 1.280000e+02 : f32
    %22 = vector.broadcast %cst_11 : f32 to vector<40x1xf32>
    %23 = arith.divf %21, %22 : vector<40x1xf32>
    %24 = vector.broadcast %16 : vector<40x1xf32> to vector<40x128xf32>
    %25 = arith.subf %12, %24 : vector<40x128xf32>
    %cst_12 = arith.constant 9.99999974E-6 : f32
    %26 = vector.broadcast %cst_12 : f32 to vector<40x1xf32>
    %27 = arith.addf %23, %26 : vector<40x1xf32>
    %28 = math.rsqrt %27 : vector<40x1xf32>
    %29 = vector.broadcast %28 : vector<40x1xf32> to vector<40x128xf32>
    %30 = arith.mulf %25, %29 : vector<40x128xf32>
    %c0_13 = arith.constant 0 : index
    %c0_14 = arith.constant 0 : index
    %31 = vector.load %arg5[%c0_13, %c0_14] : memref<1x128xf32, #tpu.memory_space<vmem>>, vector<1x128xf32>
    %32 = vector.broadcast %31 : vector<1x128xf32> to vector<40x128xf32>
    %33 = arith.mulf %30, %32 : vector<40x128xf32>
    %c0_15 = arith.constant 0 : index
    %c0_16 = arith.constant 0 : index
    %34 = vector.load %arg6[%c0_15, %c0_16] : memref<1x128xf32, #tpu.memory_space<vmem>>, vector<1x128xf32>
    %35 = vector.broadcast %34 : vector<1x128xf32> to vector<40x128xf32>
    %36 = arith.addf %33, %35 : vector<40x128xf32>
    %37 = arith.truncf %36 : vector<40x128xf32> to vector<40x128xbf16>
    %c0_17 = arith.constant 0 : index
    %c0_18 = arith.constant 0 : index
    %38 = vector.load %arg7[%c0_17, %c0_18] : memref<128x128xbf16, #tpu.memory_space<vmem>>, vector<128x128xbf16>
    %cst_19 = arith.constant dense<0.000000e+00> : vector<40x128xf32>
    %39 = tpu.matmul %37, %38, %cst_19 {dimension_numbers = #tpu.dot_dimension_numbers<[1], [0], [0], [1], [0, 0, 1, 1], [], []>} : vector<40x128xbf16>, vector<128x128xbf16>, vector<40x128xf32> -> vector<40x128xf32>
    %40 = arith.mulf %39, %39 : vector<40x128xf32>
    %cst_20 = arith.constant dense<0.000000e+00> : vector<40xf32>
    %41 = vector.multi_reduction <add>, %40, %cst_20 [1] : vector<40x128xf32> to vector<40xf32>
    %42 = vector.shape_cast %41 : vector<40xf32> to vector<40x1xf32>
    %cst_21 = arith.constant 9.99999996E-13 : f32
    %43 = vector.broadcast %cst_21 : f32 to vector<40x1xf32>
    %44 = arith.addf %42, %43 : vector<40x1xf32>
    %45 = math.rsqrt %44 : vector<40x1xf32>
    %46 = vector.broadcast %45 : vector<40x1xf32> to vector<40x128xf32>
    %47 = arith.mulf %39, %46 : vector<40x128xf32>
    %48 = vector.extract_strided_slice %47 {offsets = [0, 0], sizes = [32, 128], strides = [1, 1]} : vector<40x128xf32> to vector<32x128xf32>
    %49 = vector.extract_strided_slice %47 {offsets = [32, 0], sizes = [8, 128], strides = [1, 1]} : vector<40x128xf32> to vector<8x128xf32>
    %50 = vector.shape_cast %48 : vector<32x128xf32> to vector<4x8x128xf32>
    %cst_22 = arith.constant dense<0.000000e+00> : vector<4x128xf32>
    %51 = vector.multi_reduction <add>, %50, %cst_22 [1] : vector<4x8x128xf32> to vector<4x128xf32>
    %cst_23 = arith.constant 8.000000e+00 : f32
    %52 = vector.broadcast %cst_23 : f32 to vector<4x128xf32>
    %53 = arith.divf %51, %52 : vector<4x128xf32>
    %54 = vector.shape_cast %53 : vector<4x128xf32> to vector<4x1x128xf32>
    %55 = vector.broadcast %54 : vector<4x1x128xf32> to vector<4x8x128xf32>
    %56 = arith.subf %50, %55 : vector<4x8x128xf32>
    %57 = vector.shape_cast %56 : vector<4x8x128xf32> to vector<4x1024xf32>
    %58 = arith.truncf %11 : vector<2x128xf32> to vector<2x128xbf16>
    %59 = arith.truncf %53 : vector<4x128xf32> to vector<4x128xbf16>
    %cst_24 = arith.constant dense<0.000000e+00> : vector<2x4xf32>
    %60 = tpu.matmul %58, %59, %cst_24 {dimension_numbers = #tpu.dot_dimension_numbers<[1], [1], [0], [0], [0, 0, 1, 0], [], []>} : vector<2x128xbf16>, vector<4x128xbf16>, vector<2x4xf32> -> vector<2x4xf32>
    %61 = vector.broadcast %0 : f32 to vector<2x4xf32>
    %62 = arith.mulf %61, %60 : vector<2x4xf32>
    %63 = arith.mulf %11, %11 : vector<2x128xf32>
    %64 = tpu.iota {dimensions = array<i32: 1>} : vector<1x4xi32>
    %65 = tpu.iota {dimensions = array<i32: 0>} : vector<4x1xi32>
    %66 = tpu.iota {dimensions = array<i32: 0>} : vector<4x4xi32>
    %67 = tpu.iota {dimensions = array<i32: 1>} : vector<4x4xi32>
    %68 = arith.cmpi eq, %66, %67 : vector<4x4xi32>
    %69 = arith.extui %68 : vector<4x4xi1> to vector<4x4xi32>
    %70 = arith.sitofp %69 : vector<4x4xi32> to vector<4x4xf32>
    %c0_25 = arith.constant 0 : index
    %71 = memref.load %arg0[%c0_25] : memref<2xi32, #tpu.memory_space<smem>>
    %72 = vector.broadcast %71 : i32 to vector<1x4xi32>
    %73 = arith.cmpi eq, %64, %72 : vector<1x4xi32>
    %74 = arith.extui %73 : vector<1x4xi1> to vector<1x4xi32>
    %75 = arith.sitofp %74 : vector<1x4xi32> to vector<1x4xf32>
    %76 = vector.broadcast %71 : i32 to vector<4x1xi32>
    %77 = arith.cmpi eq, %65, %76 : vector<4x1xi32>
    %78 = arith.extui %77 : vector<4x1xi1> to vector<4x1xi32>
    %79 = arith.sitofp %78 : vector<4x1xi32> to vector<4x1xf32>
    %80 = vector.extract_strided_slice %63 {offsets = [0, 0], sizes = [1, 128], strides = [1, 1]} : vector<2x128xf32> to vector<1x128xf32>
    %81 = vector.shape_cast %80 : vector<1x128xf32> to vector<1x1x128xf32>
    %82 = vector.broadcast %81 : vector<1x1x128xf32> to vector<4x8x128xf32>
    %83 = arith.mulf %56, %82 : vector<4x8x128xf32>
    %84 = vector.shape_cast %83 : vector<4x8x128xf32> to vector<4x1024xf32>
    %cst_26 = arith.constant dense<0.000000e+00> : vector<4x4xf32>
    %85 = tpu.matmul %84, %57, %cst_26 {dimension_numbers = #tpu.dot_dimension_numbers<[1], [1], [0], [0], [0, 0, 1, 0], [], []>} : vector<4x1024xf32>, vector<4x1024xf32>, vector<4x4xf32> -> vector<4x4xf32>
    %cst_27 = arith.constant 0.111111112 : f32
    %86 = vector.broadcast %cst_27 : f32 to vector<4x4xf32>
    %87 = arith.mulf %85, %86 : vector<4x4xf32>
    %88 = arith.mulf %87, %70 : vector<4x4xf32>
    %cst_28 = arith.constant dense<0.000000e+00> : vector<4xf32>
    %89 = vector.multi_reduction <add>, %88, %cst_28 [0] : vector<4x4xf32> to vector<4xf32>
    %90 = vector.shape_cast %89 : vector<4xf32> to vector<1x4xf32>
    %91 = vector.broadcast %79 : vector<4x1xf32> to vector<4x4xf32>
    %92 = arith.mulf %87, %91 : vector<4x4xf32>
    %cst_29 = arith.constant dense<0.000000e+00> : vector<4xf32>
    %93 = vector.multi_reduction <add>, %92, %cst_29 [0] : vector<4x4xf32> to vector<4xf32>
    %94 = vector.shape_cast %93 : vector<4xf32> to vector<1x4xf32>
    %95 = arith.mulf %94, %75 : vector<1x4xf32>
    %cst_30 = arith.constant dense<0.000000e+00> : vector<1xf32>
    %96 = vector.multi_reduction <add>, %95, %cst_30 [1] : vector<1x4xf32> to vector<1xf32>
    %97 = vector.shape_cast %96 : vector<1xf32> to vector<1x1xf32>
    %98 = vector.broadcast %97 : vector<1x1xf32> to vector<1x4xf32>
    %99 = arith.addf %98, %90 : vector<1x4xf32>
    %cst_31 = arith.constant 2.000000e+00 : f32
    %100 = vector.broadcast %cst_31 : f32 to vector<1x4xf32>
    %101 = arith.mulf %100, %94 : vector<1x4xf32>
    %102 = arith.subf %99, %101 : vector<1x4xf32>
    %c1 = arith.constant 1 : index
    %103 = memref.load %arg0[%c1] : memref<2xi32, #tpu.memory_space<smem>>
    %104 = vector.broadcast %103 : i32 to vector<1x4xi32>
    %105 = arith.cmpi eq, %64, %104 : vector<1x4xi32>
    %106 = arith.extui %105 : vector<1x4xi1> to vector<1x4xi32>
    %107 = arith.sitofp %106 : vector<1x4xi32> to vector<1x4xf32>
    %108 = vector.broadcast %103 : i32 to vector<4x1xi32>
    %109 = arith.cmpi eq, %65, %108 : vector<4x1xi32>
    %110 = arith.extui %109 : vector<4x1xi1> to vector<4x1xi32>
    %111 = arith.sitofp %110 : vector<4x1xi32> to vector<4x1xf32>
    %112 = vector.extract_strided_slice %63 {offsets = [1, 0], sizes = [1, 128], strides = [1, 1]} : vector<2x128xf32> to vector<1x128xf32>
    %113 = vector.shape_cast %112 : vector<1x128xf32> to vector<1x1x128xf32>
    %114 = vector.broadcast %113 : vector<1x1x128xf32> to vector<4x8x128xf32>
    %115 = arith.mulf %56, %114 : vector<4x8x128xf32>
    %116 = vector.shape_cast %115 : vector<4x8x128xf32> to vector<4x1024xf32>
    %cst_32 = arith.constant dense<0.000000e+00> : vector<4x4xf32>
    %117 = tpu.matmul %116, %57, %cst_32 {dimension_numbers = #tpu.dot_dimension_numbers<[1], [1], [0], [0], [0, 0, 1, 0], [], []>} : vector<4x1024xf32>, vector<4x1024xf32>, vector<4x4xf32> -> vector<4x4xf32>
    %cst_33 = arith.constant 0.111111112 : f32
    %118 = vector.broadcast %cst_33 : f32 to vector<4x4xf32>
    %119 = arith.mulf %117, %118 : vector<4x4xf32>
    %120 = arith.mulf %119, %70 : vector<4x4xf32>
    %cst_34 = arith.constant dense<0.000000e+00> : vector<4xf32>
    %121 = vector.multi_reduction <add>, %120, %cst_34 [0] : vector<4x4xf32> to vector<4xf32>
    %122 = vector.shape_cast %121 : vector<4xf32> to vector<1x4xf32>
    %123 = vector.broadcast %111 : vector<4x1xf32> to vector<4x4xf32>
    %124 = arith.mulf %119, %123 : vector<4x4xf32>
    %cst_35 = arith.constant dense<0.000000e+00> : vector<4xf32>
    %125 = vector.multi_reduction <add>, %124, %cst_35 [0] : vector<4x4xf32> to vector<4xf32>
    %126 = vector.shape_cast %125 : vector<4xf32> to vector<1x4xf32>
    %127 = arith.mulf %126, %107 : vector<1x4xf32>
    %cst_36 = arith.constant dense<0.000000e+00> : vector<1xf32>
    %128 = vector.multi_reduction <add>, %127, %cst_36 [1] : vector<1x4xf32> to vector<1xf32>
    %129 = vector.shape_cast %128 : vector<1xf32> to vector<1x1xf32>
    %130 = vector.broadcast %129 : vector<1x1xf32> to vector<1x4xf32>
    %131 = arith.addf %130, %122 : vector<1x4xf32>
    %cst_37 = arith.constant 2.000000e+00 : f32
    %132 = vector.broadcast %cst_37 : f32 to vector<1x4xf32>
    %133 = arith.mulf %132, %126 : vector<1x4xf32>
    %134 = arith.subf %131, %133 : vector<1x4xf32>
    %135 = tpu.concatenate %102, %134 in 0 : vector<1x4xf32>, vector<1x4xf32> -> vector<2x4xf32>
    %136 = tpu.concatenate %75, %107 in 0 : vector<1x4xf32>, vector<1x4xf32> -> vector<2x4xf32>
    %cst_38 = arith.constant 5.000000e-01 : f32
    %137 = arith.mulf %cst_38, %0 : f32
    %138 = arith.mulf %137, %0 : f32
    %139 = vector.broadcast %138 : f32 to vector<2x4xf32>
    %140 = arith.mulf %139, %135 : vector<2x4xf32>
    %141 = arith.addf %62, %140 : vector<2x4xf32>
    %cst_39 = arith.constant dense<0xFF800000> : vector<2xf32>
    %142 = vector.multi_reduction <maximumf>, %141, %cst_39 [1] : vector<2x4xf32> to vector<2xf32>
    %143 = vector.shape_cast %142 : vector<2xf32> to vector<2x1xf32>
    %144 = vector.broadcast %143 : vector<2x1xf32> to vector<2x4xf32>
    %145 = arith.subf %141, %144 : vector<2x4xf32>
    %146 = math.exp %145 : vector<2x4xf32>
    %cst_40 = arith.constant dense<0.000000e+00> : vector<2xf32>
    %147 = vector.multi_reduction <add>, %146, %cst_40 [1] : vector<2x4xf32> to vector<2xf32>
    %148 = vector.shape_cast %147 : vector<2xf32> to vector<2x1xf32>
    %149 = math.log %148 : vector<2x1xf32>
    %150 = arith.addf %143, %149 : vector<2x1xf32>
    %151 = arith.mulf %136, %141 : vector<2x4xf32>
    %cst_41 = arith.constant dense<0.000000e+00> : vector<2xf32>
    %152 = vector.multi_reduction <add>, %151, %cst_41 [1] : vector<2x4xf32> to vector<2xf32>
    %153 = vector.shape_cast %152 : vector<2xf32> to vector<2x1xf32>
    %154 = arith.subf %150, %153 : vector<2x1xf32>
    %cst_42 = arith.constant dense<0.000000e+00> : vector<1xf32>
    %155 = vector.multi_reduction <add>, %154, %cst_42 [0] : vector<2x1xf32> to vector<1xf32>
    %156 = vector.shape_cast %155 : vector<1xf32> to vector<1x1xf32>
    %cst_43 = arith.constant 5.000000e-01 : f32
    %157 = vector.broadcast %cst_43 : f32 to vector<1x1xf32>
    %158 = arith.mulf %156, %157 : vector<1x1xf32>
    %cst_44 = arith.constant dense<0.000000e+00> : vector<8x8xf32>
    %159 = tpu.matmul %49, %49, %cst_44 {dimension_numbers = #tpu.dot_dimension_numbers<[1], [1], [0], [0], [0, 0, 1, 0], [], []>} : vector<8x128xf32>, vector<8x128xf32>, vector<8x8xf32> -> vector<8x8xf32>
    %160 = tpu.iota {dimensions = array<i32: 0>} : vector<8x8xi32>
    %161 = tpu.iota {dimensions = array<i32: 1>} : vector<8x8xi32>
    %162 = arith.cmpi ne, %160, %161 : vector<8x8xi32>
    %163 = arith.extui %162 : vector<8x8xi1> to vector<8x8xi32>
    %164 = arith.sitofp %163 : vector<8x8xi32> to vector<8x8xf32>
    %165 = math.absf %159 : vector<8x8xf32>
    %166 = arith.mulf %165, %164 : vector<8x8xf32>
    %cst_45 = arith.constant dense<0.000000e+00> : vector<8xf32>
    %167 = vector.multi_reduction <add>, %166, %cst_45 [1] : vector<8x8xf32> to vector<8xf32>
    %168 = vector.shape_cast %167 : vector<8xf32> to vector<8x1xf32>
    %cst_46 = arith.constant dense<0.000000e+00> : vector<1xf32>
    %169 = vector.multi_reduction <add>, %168, %cst_46 [0] : vector<8x1xf32> to vector<1xf32>
    %170 = vector.shape_cast %169 : vector<1xf32> to vector<1x1xf32>
    %cst_47 = arith.constant 0.0178571437 : f32
    %171 = vector.broadcast %cst_47 : f32 to vector<1x1xf32>
    %172 = arith.mulf %170, %171 : vector<1x1xf32>
    %cst_48 = arith.constant 1.000000e-01 : f32
    %173 = vector.broadcast %cst_48 : f32 to vector<1x1xf32>
    %174 = arith.mulf %173, %172 : vector<1x1xf32>
    %175 = arith.addf %158, %174 : vector<1x1xf32>
    %c0_49 = arith.constant 0 : index
    %c0_50 = arith.constant 0 : index
    %176 = vector.load %arg8[%c0_49, %c0_50] : memref<1x1xf32, #tpu.memory_space<vmem>>, vector<1x1xf32>
    tpu.vector_store %arg8[%c0_49, %c0_50], %175 {strides = array<i32>} : memref<1x1xf32, #tpu.memory_space<vmem>>, vector<1x1xf32>,
    return
  }
}

</mosaic_0001>

<llo_original>
// kernel: tpu_custom_call.1
$region0: #{tpu_custom_call.1}
  #allocation0 [shape = 'u32[]', space=smem, size = 0x4, offset = 0x4, fixed_abs, tag = 'smem constant byte address 0x4 - core index']
  #allocation1 [shape = 'u32[144,128]{1,0:T(1,128)}', space=vmem, size = 0x12000, scoped, tag = 'internal scratch']
  #allocation2 [shape = 'f32[1]{0:T(128)S(6)}', space=smem, size = 0x200, scoped, tag = 'scoped memory for tpu_custom_call.1']
  %s0 = inlined_call_operand.vmem [shape: s32[2], index: 0, kind: input, shape index: {}]
  %s1 = inlined_call_operand.<no memory space> [shape: f32[1], index: 1, kind: input, shape index: {}]
  %s2 = inlined_call_operand.hbm [shape: bf16[2,1024], index: 2, kind: input, shape index: {}]
  %s3 = inlined_call_operand.hbm [shape: bf16[1024,128], index: 3, kind: input, shape index: {}]
  %s4 = inlined_call_operand.hbm [shape: f32[40,128], index: 4, kind: input, shape index: {}]
  %s5 = inlined_call_operand.vmem [shape: f32[1,128], index: 5, kind: input, shape index: {}]
  %s6 = inlined_call_operand.vmem [shape: f32[1,128], index: 6, kind: input, shape index: {}]
  %s7 = inlined_call_operand.hbm [shape: bf16[128,128], index: 7, kind: input, shape index: {}]
  %s8 = inlined_call_operand.hbm [shape: f32[1,1], index: 8, kind: output, shape index: {}]
  %s9 = sld [smem:[#allocation0]]
  $region62: #{tpu_custom_call.1} parent=0
    _
  %s11 = ssub.s32 1, %s9
  %s12 = scalar_select 0, %s11, %s9
  %13 = sst [smem:[#allocation2]] %s1
  $region1: #{tpu_custom_call.1} parent=0
    #allocation3 [shape = 'u8[512]{0}', space=smem, size = 0x200, scoped, tag = 'input window, operand 0, single buffered']
    #allocation4 [shape = 's32[1]{0}', space=sflag, size = 0x4, scoped, tag = 'scoped memory for tpu_custom_call.1']
    #allocation5 [shape = 's32[1]{0}', space=sflag, size = 0x4, scoped, tag = 'scoped memory for tpu_custom_call.1']
    #allocation6 [shape = 's32[1]{0}', space=sflag, size = 0x4, scoped, tag = 'scoped memory for tpu_custom_call.1']
    #allocation7 [shape = 'u8[4096]{0}', space=vmem, size = 0x1000, scoped, tag = 'input window, operand 2, single buffered']
    #allocation8 [shape = 'u8[262144]{0}', space=vmem, size = 0x40000, scoped, tag = 'input window, operand 3, single buffered']
    #allocation9 [shape = 's32[1]{0}', space=sflag, size = 0x4, scoped, tag = 'scoped memory for tpu_custom_call.1']
    #allocation10 [shape = 'u8[20480]{0}', space=vmem, size = 0x5000, scoped, tag = 'input window, operand 4, single buffered']
    #allocation11 [shape = 'u8[32768]{0}', space=vmem, size = 0x8000, scoped, tag = 'input window, operand 7, single buffered']
    #allocation12 [shape = 's32[1]{0}', space=sflag, size = 0x4, scoped, tag = 'scoped memory for tpu_custom_call.1']
    #allocation13 [shape = 'u8[512]{0}', space=vmem, size = 0x400, scoped, tag = 'output window, operand 0, single buffered']
    %14 = vsyncpa [#allocation6], 0
    %15 = vsyncpa [#allocation4], 0
    %16 = vsyncpa [#allocation9], 0
    %17 = vsyncpa [#allocation12], 0
    %18 = vsyncpa [#allocation5], 0
    // Predicated region
    $region2: #{tpu_custom_call.1} parent=1 // pred_check
      _
    $region3: #{tpu_custom_call.1} parent=1 // pred_check_branch
      %20 = sbr.rel (0) target = $region5
    $region4: #{tpu_custom_call.1} parent=1 // pred_region
      %s22 = ssub.s32 16, 16
      %23 = vsyncadd [#allocation6], %s22
      %s25 = sshll.u32 %s0, 4
      %s26 = int_to_ptr.vmem [resolvable:$true] %s25
      %28 = dma.vmem_to_smem %s26, 16, [#allocation3], [#allocation6]
    $region5: #{tpu_custom_call.1} parent=1 // pred_fallthru
      _
    // Predicated region
    $region6: #{tpu_custom_call.1} parent=1 // pred_check
      _
    $region7: #{tpu_custom_call.1} parent=1 // pred_check_branch
      %30 = sbr.rel (0) target = $region9
    $region8: #{tpu_custom_call.1} parent=1 // pred_region
      _
    $region9: #{tpu_custom_call.1} parent=1 // pred_fallthru
      _
    // Predicated region
    $region10: #{tpu_custom_call.1} parent=1 // pred_check
      _
    $region11: #{tpu_custom_call.1} parent=1 // pred_check_branch
      %32 = sbr.rel (0) target = $region13
    $region12: #{tpu_custom_call.1} parent=1 // pred_region
      %s34 = ssub.s32 128, 128
      %35 = vsyncadd [#allocation4], %s34
      %s37 = sshll.u32 [#allocation7], 4
      %s38 = int_to_ptr.vmem [resolvable:$true] %s37
      %40 = dma.hbm_to_vmem [thread:$0]  %s2, 128, %s38, [#allocation4]
    $region13: #{tpu_custom_call.1} parent=1 // pred_fallthru
      _
    // Predicated region
    $region14: #{tpu_custom_call.1} parent=1 // pred_check
      _
    $region15: #{tpu_custom_call.1} parent=1 // pred_check_branch
      %42 = sbr.rel (0) target = $region17
    $region16: #{tpu_custom_call.1} parent=1 // pred_region
      %s44 = ssub.s32 8192, 8192
      %45 = vsyncadd [#allocation9], %s44
      %s46 = sshll.u32 [#allocation8], 4
      %s47 = int_to_ptr.vmem [resolvable:$true] %s46
      %52 = dma.hbm_to_vmem [thread:$0]  %s3, 8192, %s47, [#allocation9], 64, 64, 4
    $region17: #{tpu_custom_call.1} parent=1 // pred_fallthru
      _
    // Predicated region
    $region18: #{tpu_custom_call.1} parent=1 // pred_check
      _
    $region19: #{tpu_custom_call.1} parent=1 // pred_check_branch
      %54 = sbr.rel (0) target = $region21
    $region20: #{tpu_custom_call.1} parent=1 // pred_region
      %s56 = ssub.s32 640, 640
      %57 = vsyncadd [#allocation9], %s56
      %s58 = sshll.u32 [#allocation10], 4
      %s59 = int_to_ptr.vmem [resolvable:$true] %s58
      %64 = dma.hbm_to_vmem [thread:$0]  %s4, 640, %s59, [#allocation9], 128, 128, 8
    $region21: #{tpu_custom_call.1} parent=1 // pred_fallthru
      _
    // Predicated region
    $region22: #{tpu_custom_call.1} parent=1 // pred_check
      _
    $region23: #{tpu_custom_call.1} parent=1 // pred_check_branch
      %66 = sbr.rel (0) target = $region25
    $region24: #{tpu_custom_call.1} parent=1 // pred_region
      _
    $region25: #{tpu_custom_call.1} parent=1 // pred_fallthru
      _
    // Predicated region
    $region26: #{tpu_custom_call.1} parent=1 // pred_check
      _
    $region27: #{tpu_custom_call.1} parent=1 // pred_check_branch
      %68 = sbr.rel (0) target = $region29
    $region28: #{tpu_custom_call.1} parent=1 // pred_region
      _
    $region29: #{tpu_custom_call.1} parent=1 // pred_fallthru
      _
    // Predicated region
    $region30: #{tpu_custom_call.1} parent=1 // pred_check
      _
    $region31: #{tpu_custom_call.1} parent=1 // pred_check_branch
      %70 = sbr.rel (0) target = $region33
    $region32: #{tpu_custom_call.1} parent=1 // pred_region
      %s72 = ssub.s32 1024, 1024
      %73 = vsyncadd [#allocation12], %s72
      %s74 = sshll.u32 [#allocation11], 4
      %s75 = int_to_ptr.vmem [resolvable:$true] %s74
      %80 = dma.hbm_to_vmem [thread:$0]  %s7, 1024, %s75, [#allocation12], 64, 64, 4
    $region33: #{tpu_custom_call.1} parent=1 // pred_fallthru
      _
    // Predicated region
    $region34: #{tpu_custom_call.1} parent=1 // pred_check
      _
    $region35: #{tpu_custom_call.1} parent=1 // pred_check_branch
      %82 = sbr.rel (0) target = $region37
    $region36: #{tpu_custom_call.1} parent=1 // pred_region
      %83 = dma.done [#allocation6], 16
    $region37: #{tpu_custom_call.1} parent=1 // pred_fallthru
      _
    // Predicated region
    $region38: #{tpu_custom_call.1} parent=1 // pred_check
      _
    $region39: #{tpu_custom_call.1} parent=1 // pred_check_branch
      %85 = sbr.rel (0) target = $region41
    $region40: #{tpu_custom_call.1} parent=1 // pred_region
      %86 = dma.done [#allocation4], 128
    $region41: #{tpu_custom_call.1} parent=1 // pred_fallthru
      _
    // Predicated region
    $region42: #{tpu_custom_call.1} parent=1 // pred_check
      _
    $region43: #{tpu_custom_call.1} parent=1 // pred_check_branch
      %88 = sbr.rel (0) target = $region45
    $region44: #{tpu_custom_call.1} parent=1 // pred_region
      %89 = dma.done [#allocation9], 8192
    $region45: #{tpu_custom_call.1} parent=1 // pred_fallthru
      _
    // Predicated region
    $region46: #{tpu_custom_call.1} parent=1 // pred_check
      _
    $region47: #{tpu_custom_call.1} parent=1 // pred_check_branch
      %91 = sbr.rel (0) target = $region49
    $region48: #{tpu_custom_call.1} parent=1 // pred_region
      %92 = dma.done [#allocation9], 640
    $region49: #{tpu_custom_call.1} parent=1 // pred_fallthru
      _
    // Predicated region
    $region50: #{tpu_custom_call.1} parent=1 // pred_check
      _
    $region51: #{tpu_custom_call.1} parent=1 // pred_check_branch
      %94 = sbr.rel (0) target = $region53
    $region52: #{tpu_custom_call.1} parent=1 // pred_region
      %95 = dma.done [#allocation12], 1024
    $region53: #{tpu_custom_call.1} parent=1 // pred_fallthru
      _
    %96 = sfence
    %s98 = sld [smem:[#allocation2]]
    %v99 = vld [vmem:[#allocation7] sm:$0xff]
    %v100 = vld [vmem:[#allocation8] sm:$0xf]
    %v101 = vld [vmem:[#allocation8 + $0x4] sm:$0xf]
    %v102 = vld [vmem:[#allocation8 + $0x8] sm:$0xf]
    %v103 = vld [vmem:[#allocation8 + $0xc] sm:$0xf]
    %v104 = vld [vmem:[#allocation8 + $0x10] sm:$0xf]
    %v105 = vld [vmem:[#allocation8 + $0x14] sm:$0xf]
    %v106 = vld [vmem:[#allocation8 + $0x18] sm:$0xf]
    %v107 = vld [vmem:[#allocation8 + $0x1c] sm:$0xf]
    %v108 = vld [vmem:[#allocation8 + $0x20] sm:$0xf]
    %v109 = vld [vmem:[#allocation8 + $0x24] sm:$0xf]
    %v110 = vld [vmem:[#allocation8 + $0x28] sm:$0xf]
    %v111 = vld [vmem:[#allocation8 + $0x2c] sm:$0xf]
    %v112 = vld [vmem:[#allocation8 + $0x30] sm:$0xf]
    %v113 = vld [vmem:[#allocation8 + $0x34] sm:$0xf]
    %v114 = vld [vmem:[#allocation8 + $0x38] sm:$0xf]
    %v115 = vld [vmem:[#allocation8 + $0x3c] sm:$0xf]
    %v116 = vld [vmem:[#allocation8 + $0x40] sm:$0xf]
    %v117 = vld [vmem:[#allocation8 + $0x44] sm:$0xf]
    %v118 = vld [vmem:[#allocation8 + $0x48] sm:$0xf]
    %v119 = vld [vmem:[#allocation8 + $0x4c] sm:$0xf]
    %v120 = vld [vmem:[#allocation8 + $0x50] sm:$0xf]
    %v121 = vld [vmem:[#allocation8 + $0x54] sm:$0xf]
    %v122 = vld [vmem:[#allocation8 + $0x58] sm:$0xf]
    %v123 = vld [vmem:[#allocation8 + $0x5c] sm:$0xf]
    %v124 = vld [vmem:[#allocation8 + $0x60] sm:$0xf]
    %v125 = vld [vmem:[#allocation8 + $0x64] sm:$0xf]
    %v126 = vld [vmem:[#allocation8 + $0x68] sm:$0xf]
    %v127 = vld [vmem:[#allocation8 + $0x6c] sm:$0xf]
    %v128 = vld [vmem:[#allocation8 + $0x70] sm:$0xf]
    %v129 = vld [vmem:[#allocation8 + $0x74] sm:$0xf]
    %v130 = vld [vmem:[#allocation8 + $0x78] sm:$0xf]
    %v131 = vld [vmem:[#allocation8 + $0x7c] sm:$0xf]
    %v132 = vld [vmem:[#allocation8 + $0x80] sm:$0xf]
    %v133 = vld [vmem:[#allocation8 + $0x84] sm:$0xf]
    %v134 = vld [vmem:[#allocation8 + $0x88] sm:$0xf]
    %v135 = vld [vmem:[#allocation8 + $0x8c] sm:$0xf]
    %v136 = vld [vmem:[#allocation8 + $0x90] sm:$0xf]
    %v137 = vld [vmem:[#allocation8 + $0x94] sm:$0xf]
    %v138 = vld [vmem:[#allocation8 + $0x98] sm:$0xf]
    %v139 = vld [vmem:[#allocation8 + $0x9c] sm:$0xf]
    %v140 = vld [vmem:[#allocation8 + $0xa0] sm:$0xf]
    %v141 = vld [vmem:[#allocation8 + $0xa4] sm:$0xf]
    %v142 = vld [vmem:[#allocation8 + $0xa8] sm:$0xf]
    %v143 = vld [vmem:[#allocation8 + $0xac] sm:$0xf]
    %v144 = vld [vmem:[#allocation8 + $0xb0] sm:$0xf]
    %v145 = vld [vmem:[#allocation8 + $0xb4] sm:$0xf]
    %v146 = vld [vmem:[#allocation8 + $0xb8] sm:$0xf]
    %v147 = vld [vmem:[#allocation8 + $0xbc] sm:$0xf]
    %v148 = vld [vmem:[#allocation8 + $0xc0] sm:$0xf]
    %v149 = vld [vmem:[#allocation8 + $0xc4] sm:$0xf]
    %v150 = vld [vmem:[#allocation8 + $0xc8] sm:$0xf]
    %v151 = vld [vmem:[#allocation8 + $0xcc] sm:$0xf]
    %v152 = vld [vmem:[#allocation8 + $0xd0] sm:$0xf]
    %v153 = vld [vmem:[#allocation8 + $0xd4] sm:$0xf]
    %v154 = vld [vmem:[#allocation8 + $0xd8] sm:$0xf]
    %v155 = vld [vmem:[#allocation8 + $0xdc] sm:$0xf]
    %v156 = vld [vmem:[#allocation8 + $0xe0] sm:$0xf]
    %v157 = vld [vmem:[#allocation8 + $0xe4] sm:$0xf]
    %v158 = vld [vmem:[#allocation8 + $0xe8] sm:$0xf]
    %v159 = vld [vmem:[#allocation8 + $0xec] sm:$0xf]
    %v160 = vld [vmem:[#allocation8 + $0xf0] sm:$0xf]
    %v161 = vld [vmem:[#allocation8 + $0xf4] sm:$0xf]
    %v162 = vld [vmem:[#allocation8 + $0xf8] sm:$0xf]
    %v163 = vld [vmem:[#allocation8 + $0xfc] sm:$0xf]
    %v164 = vld [vmem:[#allocation8 + $0x100] sm:$0xf]
    %v165 = vld [vmem:[#allocation8 + $0x104] sm:$0xf]
    %v166 = vld [vmem:[#allocation8 + $0x108] sm:$0xf]
    %v167 = vld [vmem:[#allocation8 + $0x10c] sm:$0xf]
    %v168 = vld [vmem:[#allocation8 + $0x110] sm:$0xf]
    %v169 = vld [vmem:[#allocation8 + $0x114] sm:$0xf]
    %v170 = vld [vmem:[#allocation8 + $0x118] sm:$0xf]
    %v171 = vld [vmem:[#allocation8 + $0x11c] sm:$0xf]
    %v172 = vld [vmem:[#allocation8 + $0x120] sm:$0xf]
    %v173 = vld [vmem:[#allocation8 + $0x124] sm:$0xf]
    %v174 = vld [vmem:[#allocation8 + $0x128] sm:$0xf]
    %v175 = vld [vmem:[#allocation8 + $0x12c] sm:$0xf]
    %v176 = vld [vmem:[#allocation8 + $0x130] sm:$0xf]
    %v177 = vld [vmem:[#allocation8 + $0x134] sm:$0xf]
    %v178 = vld [vmem:[#allocation8 + $0x138] sm:$0xf]
    %v179 = vld [vmem:[#allocation8 + $0x13c] sm:$0xf]
    %v180 = vld [vmem:[#allocation8 + $0x140] sm:$0xf]
    %v181 = vld [vmem:[#allocation8 + $0x144] sm:$0xf]
    %v182 = vld [vmem:[#allocation8 + $0x148] sm:$0xf]
    %v183 = vld [vmem:[#allocation8 + $0x14c] sm:$0xf]
    %v184 = vld [vmem:[#allocation8 + $0x150] sm:$0xf]
    %v185 = vld [vmem:[#allocation8 + $0x154] sm:$0xf]
    %v186 = vld [vmem:[#allocation8 + $0x158] sm:$0xf]
    %v187 = vld [vmem:[#allocation8 + $0x15c] sm:$0xf]
    %v188 = vld [vmem:[#allocation8 + $0x160] sm:$0xf]
    %v189 = vld [vmem:[#allocation8 + $0x164] sm:$0xf]
    %v190 = vld [vmem:[#allocation8 + $0x168] sm:$0xf]
    %v191 = vld [vmem:[#allocation8 + $0x16c] sm:$0xf]
    %v192 = vld [vmem:[#allocation8 + $0x170] sm:$0xf]
    %v193 = vld [vmem:[#allocation8 + $0x174] sm:$0xf]
    %v194 = vld [vmem:[#allocation8 + $0x178] sm:$0xf]
    %v195 = vld [vmem:[#allocation8 + $0x17c] sm:$0xf]
    %v196 = vld [vmem:[#allocation8 + $0x180] sm:$0xf]
    %v197 = vld [vmem:[#allocation8 + $0x184] sm:$0xf]
    %v198 = vld [vmem:[#allocation8 + $0x188] sm:$0xf]
    %v199 = vld [vmem:[#allocation8 + $0x18c] sm:$0xf]
    %v200 = vld [vmem:[#allocation8 + $0x190] sm:$0xf]
    %v201 = vld [vmem:[#allocation8 + $0x194] sm:$0xf]
    %v202 = vld [vmem:[#allocation8 + $0x198] sm:$0xf]
    %v203 = vld [vmem:[#allocation8 + $0x19c] sm:$0xf]
    %v204 = vld [vmem:[#allocation8 + $0x1a0] sm:$0xf]
    %v205 = vld [vmem:[#allocation8 + $0x1a4] sm:$0xf]
    %v206 = vld [vmem:[#allocation8 + $0x1a8] sm:$0xf]
    %v207 = vld [vmem:[#allocation8 + $0x1ac] sm:$0xf]
    %v208 = vld [vmem:[#allocation8 + $0x1b0] sm:$0xf]
    %v209 = vld [vmem:[#allocation8 + $0x1b4] sm:$0xf]
    %v210 = vld [vmem:[#allocation8 + $0x1b8] sm:$0xf]
    %v211 = vld [vmem:[#allocation8 + $0x1bc] sm:$0xf]
    %v212 = vld [vmem:[#allocation8 + $0x1c0] sm:$0xf]
    %v213 = vld [vmem:[#allocation8 + $0x1c4] sm:$0xf]
    %v214 = vld [vmem:[#allocation8 + $0x1c8] sm:$0xf]
    %v215 = vld [vmem:[#allocation8 + $0x1cc] sm:$0xf]
    %v216 = vld [vmem:[#allocation8 + $0x1d0] sm:$0xf]
    %v217 = vld [vmem:[#allocation8 + $0x1d4] sm:$0xf]
    %v218 = vld [vmem:[#allocation8 + $0x1d8] sm:$0xf]
    %v219 = vld [vmem:[#allocation8 + $0x1dc] sm:$0xf]
    %v220 = vld [vmem:[#allocation8 + $0x1e0] sm:$0xf]
    %v221 = vld [vmem:[#allocation8 + $0x1e4] sm:$0xf]
    %v222 = vld [vmem:[#allocation8 + $0x1e8] sm:$0xf]
    %v223 = vld [vmem:[#allocation8 + $0x1ec] sm:$0xf]
    %v224 = vld [vmem:[#allocation8 + $0x1f0] sm:$0xf]
    %v225 = vld [vmem:[#allocation8 + $0x1f4] sm:$0xf]
    %v226 = vld [vmem:[#allocation8 + $0x1f8] sm:$0xf]
    %v227 = vld [vmem:[#allocation8 + $0x1fc] sm:$0xf]
    %v229 = vcombine.high %v99, %v99
    %v231 = vunpack.c.l.s4 1966171168
    %v232 = vunpack.c.0.s8 %v231
    %v233 = vlaneseq
    %v234 = vshrl.u32 %v233, 7
    %v235 = vsub.s32 %v232, %v234
    %v236 = vrot.slane %v99, %v235
    %v238 = vunpack.c.l.s4 1966171168
    %v239 = vunpack.c.0.s8 %v238
    %v240 = vlaneseq
    %v241 = vshrl.u32 %v240, 7
    %v242 = vsub.s32 %v239, %v241
    %v243 = vrot.slane %v229, %v242
    %v244 = vcombine.high %v236, %v236
    %v245 = vcombine.high %v243, %v243
    %v247 = vunpack.c.l.s4 1966171168
    %v248 = vunpack.c.0.s8 %v247
    %v249 = vlaneseq
    %v250 = vshrl.u32 %v249, 7
    %v251 = vsub.s32 %v248, %v250
    %v252 = vrot.slane %v236, %v251
    %v254 = vunpack.c.l.s4 1966171168
    %v255 = vunpack.c.0.s8 %v254
    %v256 = vlaneseq
    %v257 = vshrl.u32 %v256, 7
    %v258 = vsub.s32 %v255, %v257
    %v259 = vrot.slane %v243, %v258
    %v261 = vunpack.c.l.s4 1966171168
    %v262 = vunpack.c.0.s8 %v261
    %v263 = vlaneseq
    %v264 = vshrl.u32 %v263, 7
    %v265 = vsub.s32 %v262, %v264
    %v266 = vrot.slane %v244, %v265
    %v268 = vunpack.c.l.s4 1966171168
    %v269 = vunpack.c.0.s8 %v268
    %v270 = vlaneseq
    %v271 = vshrl.u32 %v270, 7
    %v272 = vsub.s32 %v269, %v271
    %v273 = vrot.slane %v245, %v272
    %v274 = vcombine.high %v252, %v252
    %v275 = vcombine.high %v259, %v259
    %v276 = vcombine.high %v266, %v266
    %v277 = vcombine.high %v273, %v273
    %v414 = vunpack.c.l.b16 %v100
    %v415 = vunpack.c.l.b16 %v101
    %v416 = vunpack.c.l.b16 %v102
    %v417 = vunpack.c.l.b16 %v103
    %v418 = vunpack.c.l.b16 %v104
    %v419 = vunpack.c.l.b16 %v105
    %v420 = vunpack.c.l.b16 %v106
    %v421 = vunpack.c.l.b16 %v107
    %v422 = vunpack.c.l.b16 %v108
    %v423 = vunpack.c.l.b16 %v109
    %v424 = vunpack.c.l.b16 %v110
    %v425 = vunpack.c.l.b16 %v111
    %v426 = vunpack.c.l.b16 %v112
    %v427 = vunpack.c.l.b16 %v113
    %v428 = vunpack.c.l.b16 %v114
    %v429 = vunpack.c.l.b16 %v115
    %v430 = vunpack.c.l.b16 %v116
    %v431 = vunpack.c.l.b16 %v117
    %v432 = vunpack.c.l.b16 %v118
    %v433 = vunpack.c.l.b16 %v119
    %v434 = vunpack.c.l.b16 %v120
    %v435 = vunpack.c.l.b16 %v121
    %v436 = vunpack.c.l.b16 %v122
    %v437 = vunpack.c.l.b16 %v123
    %v438 = vunpack.c.l.b16 %v124
    %v439 = vunpack.c.l.b16 %v125
    %v440 = vunpack.c.l.b16 %v126
    %v441 = vunpack.c.l.b16 %v127
    %v442 = vunpack.c.l.b16 %v128
    %v443 = vunpack.c.l.b16 %v129
    %v444 = vunpack.c.l.b16 %v130
    %v445 = vunpack.c.l.b16 %v131
    %v446 = vunpack.c.l.b16 %v132
    %v447 = vunpack.c.l.b16 %v133
    %v448 = vunpack.c.l.b16 %v134
    %v449 = vunpack.c.l.b16 %v135
    %v450 = vunpack.c.l.b16 %v136
    %v451 = vunpack.c.l.b16 %v137
    %v452 = vunpack.c.l.b16 %v138
    %v453 = vunpack.c.l.b16 %v139
    %v454 = vunpack.c.l.b16 %v140
    %v455 = vunpack.c.l.b16 %v141
    %v456 = vunpack.c.l.b16 %v142
    %v457 = vunpack.c.l.b16 %v143
    %v458 = vunpack.c.l.b16 %v144
    %v459 = vunpack.c.l.b16 %v145
    %v460 = vunpack.c.l.b16 %v146
    %v461 = vunpack.c.l.b16 %v147
    %v462 = vunpack.c.l.b16 %v148
    %v463 = vunpack.c.l.b16 %v149
    %v464 = vunpack.c.l.b16 %v150
    %v465 = vunpack.c.l.b16 %v151
    %v466 = vunpack.c.l.b16 %v152
    %v467 = vunpack.c.l.b16 %v153
    %v468 = vunpack.c.l.b16 %v154
    %v469 = vunpack.c.l.b16 %v155
    %v470 = vunpack.c.l.b16 %v156
    %v471 = vunpack.c.l.b16 %v157
    %v472 = vunpack.c.l.b16 %v158
    %v473 = vunpack.c.l.b16 %v159
    %v474 = vunpack.c.l.b16 %v160
    %v475 = vunpack.c.l.b16 %v161
    %v476 = vunpack.c.l.b16 %v162
    %v477 = vunpack.c.l.b16 %v163
    %v478 = vunpack.c.l.b16 %v164
    %v479 = vunpack.c.l.b16 %v165
    %v480 = vunpack.c.l.b16 %v166
    %v481 = vunpack.c.l.b16 %v167
    %v482 = vunpack.c.l.b16 %v168
    %v483 = vunpack.c.l.b16 %v169
    %v484 = vunpack.c.l.b16 %v170
    %v485 = vunpack.c.l.b16 %v171
    %v486 = vunpack.c.l.b16 %v172
    %v487 = vunpack.c.l.b16 %v173
    %v488 = vunpack.c.l.b16 %v174
    %v489 = vunpack.c.l.b16 %v175
    %v490 = vunpack.c.l.b16 %v176
    %v491 = vunpack.c.l.b16 %v177
    %v492 = vunpack.c.l.b16 %v178
    %v493 = vunpack.c.l.b16 %v179
    %v494 = vunpack.c.l.b16 %v180
    %v495 = vunpack.c.l.b16 %v181
    %v496 = vunpack.c.l.b16 %v182
    %v497 = vunpack.c.l.b16 %v183
    %v498 = vunpack.c.l.b16 %v184
    %v499 = vunpack.c.l.b16 %v185
    %v500 = vunpack.c.l.b16 %v186
    %v501 = vunpack.c.l.b16 %v187
    %v502 = vunpack.c.l.b16 %v188
    %v503 = vunpack.c.l.b16 %v189
    %v504 = vunpack.c.l.b16 %v190
    %v505 = vunpack.c.l.b16 %v191
    %v506 = vunpack.c.l.b16 %v192
    %v507 = vunpack.c.l.b16 %v193
    %v508 = vunpack.c.l.b16 %v194
    %v509 = vunpack.c.l.b16 %v195
    %v510 = vunpack.c.l.b16 %v196
    %v511 = vunpack.c.l.b16 %v197
    %v512 = vunpack.c.l.b16 %v198
    %v513 = vunpack.c.l.b16 %v199
    %v514 = vunpack.c.l.b16 %v200
    %v515 = vunpack.c.l.b16 %v201
    %v516 = vunpack.c.l.b16 %v202
    %v517 = vunpack.c.l.b16 %v203
    %v518 = vunpack.c.l.b16 %v204
    %v519 = vunpack.c.l.b16 %v205
    %v520 = vunpack.c.l.b16 %v206
    %v521 = vunpack.c.l.b16 %v207
    %v522 = vunpack.c.l.b16 %v208
    %v523 = vunpack.c.l.b16 %v209
    %v524 = vunpack.c.l.b16 %v210
    %v525 = vunpack.c.l.b16 %v211
    %v526 = vunpack.c.l.b16 %v212
    %v527 = vunpack.c.l.b16 %v213
    %v528 = vunpack.c.l.b16 %v214
    %v529 = vunpack.c.l.b16 %v215
    %v530 = vunpack.c.l.b16 %v216
    %v531 = vunpack.c.l.b16 %v217
    %v532 = vunpack.c.l.b16 %v218
    %v533 = vunpack.c.l.b16 %v219
    %v534 = vunpack.c.l.b16 %v220
    %v535 = vunpack.c.l.b16 %v221
    %v536 = vunpack.c.l.b16 %v222
    %v537 = vunpack.c.l.b16 %v223
    %v538 = vunpack.c.l.b16 %v224
    %v539 = vunpack.c.l.b16 %v225
    %v540 = vunpack.c.l.b16 %v226
    %v541 = vunpack.c.l.b16 %v227
    %v542 = vpack.c.b16 %v415, %v414
    %v543 = vpack.c.b16 %v417, %v416
    %v544 = vpack.c.b16 %v419, %v418
    %v545 = vpack.c.b16 %v421, %v420
    %v546 = vpack.c.b16 %v423, %v422
    %v547 = vpack.c.b16 %v425, %v424
    %v548 = vpack.c.b16 %v427, %v426
    %v549 = vpack.c.b16 %v429, %v428
    %v550 = vpack.c.b16 %v431, %v430
    %v551 = vpack.c.b16 %v433, %v432
    %v552 = vpack.c.b16 %v435, %v434
    %v553 = vpack.c.b16 %v437, %v436
    %v554 = vpack.c.b16 %v439, %v438
    %v555 = vpack.c.b16 %v441, %v440
    %v556 = vpack.c.b16 %v443, %v442
    %v557 = vpack.c.b16 %v445, %v444
    %v558 = vpack.c.b16 %v447, %v446
    %v559 = vpack.c.b16 %v449, %v448
    %v560 = vpack.c.b16 %v451, %v450
    %v561 = vpack.c.b16 %v453, %v452
    %v562 = vpack.c.b16 %v455, %v454
    %v563 = vpack.c.b16 %v457, %v456
    %v564 = vpack.c.b16 %v459, %v458
    %v565 = vpack.c.b16 %v461, %v460
    %v566 = vpack.c.b16 %v463, %v462
    %v567 = vpack.c.b16 %v465, %v464
    %v568 = vpack.c.b16 %v467, %v466
    %v569 = vpack.c.b16 %v469, %v468
    %v570 = vpack.c.b16 %v471, %v470
    %v571 = vpack.c.b16 %v473, %v472
    %v572 = vpack.c.b16 %v475, %v474
    %v573 = vpack.c.b16 %v477, %v476
    %v574 = vpack.c.b16 %v479, %v478
    %v575 = vpack.c.b16 %v481, %v480
    %v576 = vpack.c.b16 %v483, %v482
    %v577 = vpack.c.b16 %v485, %v484
    %v578 = vpack.c.b16 %v487, %v486
    %v579 = vpack.c.b16 %v489, %v488
    %v580 = vpack.c.b16 %v491, %v490
    %v581 = vpack.c.b16 %v493, %v492
    %v582 = vpack.c.b16 %v495, %v494
    %v583 = vpack.c.b16 %v497, %v496
    %v584 = vpack.c.b16 %v499, %v498
    %v585 = vpack.c.b16 %v501, %v500
    %v586 = vpack.c.b16 %v503, %v502
    %v587 = vpack.c.b16 %v505, %v504
    %v588 = vpack.c.b16 %v507, %v506
    %v589 = vpack.c.b16 %v509, %v508
    %v590 = vpack.c.b16 %v511, %v510
    %v591 = vpack.c.b16 %v513, %v512
    %v592 = vpack.c.b16 %v515, %v514
    %v593 = vpack.c.b16 %v517, %v516
    %v594 = vpack.c.b16 %v519, %v518
    %v595 = vpack.c.b16 %v521, %v520
    %v596 = vpack.c.b16 %v523, %v522
    %v597 = vpack.c.b16 %v525, %v524
    %v598 = vpack.c.b16 %v527, %v526
    %v599 = vpack.c.b16 %v529, %v528
    %v600 = vpack.c.b16 %v531, %v530
    %v601 = vpack.c.b16 %v533, %v532
    %v602 = vpack.c.b16 %v535, %v534
    %v603 = vpack.c.b16 %v537, %v536
    %v604 = vpack.c.b16 %v539, %v538
    %v605 = vpack.c.b16 %v541, %v540
    %670 = vmatprep.subr.bf16.mxu0 0
    %671 = vmatpush1.bf16.msra.mxu0 %v542
    %672 = vmatprep.subr.bf16.mxu0 0
    %673 = vmatpush1.bf16.msra.mxu0 %v543
    %674 = vmatprep.subr.bf16.mxu0 0
    %675 = vmatpush1.bf16.msra.mxu0 %v544
    %676 = vmatprep.subr.bf16.mxu0 0
    %677 = vmatpush1.bf16.msra.mxu0 %v545
    %678 = vmatprep.subr.bf16.mxu0 0
    %679 = vmatpush1.bf16.msra.mxu0 %v546
    %680 = vmatprep.subr.bf16.mxu0 0
    %681 = vmatpush1.bf16.msra.mxu0 %v547
    %682 = vmatprep.subr.bf16.mxu0 0
    %683 = vmatpush1.bf16.msra.mxu0 %v548
    %684 = vmatprep.subr.bf16.mxu0 0
    %685 = vmatpush1.bf16.msra.mxu0 %v549
    %686 = vmatprep.subr.bf16.mxu0 0
    %687 = vmatpush1.bf16.msra.mxu0 %v550
    %688 = vmatprep.subr.bf16.mxu0 0
    %689 = vmatpush1.bf16.msra.mxu0 %v551
    %690 = vmatprep.subr.bf16.mxu0 0
    %691 = vmatpush1.bf16.msra.mxu0 %v552
    %692 = vmatprep.subr.bf16.mxu0 0
    %693 = vmatpush1.bf16.msra.mxu0 %v553
    %694 = vmatprep.subr.bf16.mxu0 0
    %695 = vmatpush1.bf16.msra.mxu0 %v554
    %696 = vmatprep.subr.bf16.mxu0 0
    %697 = vmatpush1.bf16.msra.mxu0 %v555
    %698 = vmatprep.subr.bf16.mxu0 0
    %699 = vmatpush1.bf16.msra.mxu0 %v556
    %700 = vmatprep.subr.bf16.mxu0 0
    %701 = vmatpush1.bf16.msra.mxu0 %v557
    %702 = vmatprep.mubr.bf16.mxu0 %v266
    %703 = vmatmul.mubr.bf16.gmra.mrb[0].mxu0 %v252
    %v704 = vpop.f32.mrb[0].mxu0
    %v705 = vadd.f32 0.0, %v704
    %v706 = vpop.f32.mrb[0].mxu0
    %v707 = vpop.f32.mrb[0].mxu0
    %v708 = vpop.f32.mrb[0].mxu0
    %709 = vdwg.mxu0
    %710 = vmatprep.subr.bf16.mxu0 0
    %711 = vmatpush1.bf16.msra.mxu0 %v558
    %712 = vmatprep.subr.bf16.mxu0 0
    %713 = vmatpush1.bf16.msra.mxu0 %v559
    %714 = vmatprep.subr.bf16.mxu0 0
    %715 = vmatpush1.bf16.msra.mxu0 %v560
    %716 = vmatprep.subr.bf16.mxu0 0
    %717 = vmatpush1.bf16.msra.mxu0 %v561
    %718 = vmatprep.subr.bf16.mxu0 0
    %719 = vmatpush1.bf16.msra.mxu0 %v562
    %720 = vmatprep.subr.bf16.mxu0 0
    %721 = vmatpush1.bf16.msra.mxu0 %v563
    %722 = vmatprep.subr.bf16.mxu0 0
    %723 = vmatpush1.bf16.msra.mxu0 %v564
    %724 = vmatprep.subr.bf16.mxu0 0
    %725 = vmatpush1.bf16.msra.mxu0 %v565
    %726 = vmatprep.subr.bf16.mxu0 0
    %727 = vmatpush1.bf16.msra.mxu0 %v566
    %728 = vmatprep.subr.bf16.mxu0 0
    %729 = vmatpush1.bf16.msra.mxu0 %v567
    %730 = vmatprep.subr.bf16.mxu0 0
    %731 = vmatpush1.bf16.msra.mxu0 %v568
    %732 = vmatprep.subr.bf16.mxu0 0
    %733 = vmatpush1.bf16.msra.mxu0 %v569
    %734 = vmatprep.subr.bf16.mxu0 0
    %735 = vmatpush1.bf16.msra.mxu0 %v570
    %736 = vmatprep.subr.bf16.mxu0 0
    %737 = vmatpush1.bf16.msra.mxu0 %v571
    %738 = vmatprep.subr.bf16.mxu0 0
    %739 = vmatpush1.bf16.msra.mxu0 %v572
    %740 = vmatprep.subr.bf16.mxu0 0
    %741 = vmatpush1.bf16.msra.mxu0 %v573
    %742 = vmatprep.mubr.bf16.mxu0 %v276
    %743 = vmatmul.mubr.bf16.gmra.mrb[0].mxu0 %v274
    %v744 = vpop.f32.mrb[0].mxu0
    %v745 = vadd.f32 %v705, %v744
    %v746 = vpop.f32.mrb[0].mxu0
    %v747 = vpop.f32.mrb[0].mxu0
    %v748 = vpop.f32.mrb[0].mxu0
    %749 = vdwg.mxu0
    %750 = vmatprep.subr.bf16.mxu0 0
    %751 = vmatpush1.bf16.msra.mxu0 %v574
    %752 = vmatprep.subr.bf16.mxu0 0
    %753 = vmatpush1.bf16.msra.mxu0 %v575
    %754 = vmatprep.subr.bf16.mxu0 0
    %755 = vmatpush1.bf16.msra.mxu0 %v576
    %756 = vmatprep.subr.bf16.mxu0 0
    %757 = vmatpush1.bf16.msra.mxu0 %v577
    %758 = vmatprep.subr.bf16.mxu0 0
    %759 = vmatpush1.bf16.msra.mxu0 %v578
    %760 = vmatprep.subr.bf16.mxu0 0
    %761 = vmatpush1.bf16.msra.mxu0 %v579
    %762 = vmatprep.subr.bf16.mxu0 0
    %763 = vmatpush1.bf16.msra.mxu0 %v580
    %764 = vmatprep.subr.bf16.mxu0 0
    %765 = vmatpush1.bf16.msra.mxu0 %v581
    %766 = vmatprep.subr.bf16.mxu0 0
    %767 = vmatpush1.bf16.msra.mxu0 %v582
    %768 = vmatprep.subr.bf16.mxu0 0
    %769 = vmatpush1.bf16.msra.mxu0 %v583
    %770 = vmatprep.subr.bf16.mxu0 0
    %771 = vmatpush1.bf16.msra.mxu0 %v584
    %772 = vmatprep.subr.bf16.mxu0 0
    %773 = vmatpush1.bf16.msra.mxu0 %v585
    %774 = vmatprep.subr.bf16.mxu0 0
    %775 = vmatpush1.bf16.msra.mxu0 %v586
    %776 = vmatprep.subr.bf16.mxu0 0
    %777 = vmatpush1.bf16.msra.mxu0 %v587
    %778 = vmatprep.subr.bf16.mxu0 0
    %779 = vmatpush1.bf16.msra.mxu0 %v588
    %780 = vmatprep.subr.bf16.mxu0 0
    %781 = vmatpush1.bf16.msra.mxu0 %v589
    %782 = vmatprep.mubr.bf16.mxu0 %v273
    %783 = vmatmul.mubr.bf16.gmra.mrb[0].mxu0 %v259
    %v784 = vpop.f32.mrb[0].mxu0
    %v785 = vadd.f32 %v745, %v784
    %v786 = vpop.f32.mrb[0].mxu0
    %v787 = vpop.f32.mrb[0].mxu0
    %v788 = vpop.f32.mrb[0].mxu0
    %789 = vdwg.mxu0
    %790 = vmatprep.subr.bf16.mxu0 0
    %791 = vmatpush1.bf16.msra.mxu0 %v590
    %792 = vmatprep.subr.bf16.mxu0 0
    %793 = vmatpush1.bf16.msra.mxu0 %v591
    %794 = vmatprep.subr.bf16.mxu0 0
    %795 = vmatpush1.bf16.msra.mxu0 %v592
    %796 = vmatprep.subr.bf16.mxu0 0
    %797 = vmatpush1.bf16.msra.mxu0 %v593
    %798 = vmatprep.subr.bf16.mxu0 0
    %799 = vmatpush1.bf16.msra.mxu0 %v594
    %800 = vmatprep.subr.bf16.mxu0 0
    %801 = vmatpush1.bf16.msra.mxu0 %v595
    %802 = vmatprep.subr.bf16.mxu0 0
    %803 = vmatpush1.bf16.msra.mxu0 %v596
    %804 = vmatprep.subr.bf16.mxu0 0
    %805 = vmatpush1.bf16.msra.mxu0 %v597
    %806 = vmatprep.subr.bf16.mxu0 0
    %807 = vmatpush1.bf16.msra.mxu0 %v598
    %808 = vmatprep.subr.bf16.mxu0 0
    %809 = vmatpush1.bf16.msra.mxu0 %v599
    %810 = vmatprep.subr.bf16.mxu0 0
    %811 = vmatpush1.bf16.msra.mxu0 %v600
    %812 = vmatprep.subr.bf16.mxu0 0
    %813 = vmatpush1.bf16.msra.mxu0 %v601
    %814 = vmatprep.subr.bf16.mxu0 0
    %815 = vmatpush1.bf16.msra.mxu0 %v602
    %816 = vmatprep.subr.bf16.mxu0 0
    %817 = vmatpush1.bf16.msra.mxu0 %v603
    %818 = vmatprep.subr.bf16.mxu0 0
    %819 = vmatpush1.bf16.msra.mxu0 %v604
    %820 = vmatprep.subr.bf16.mxu0 0
    %821 = vmatpush1.bf16.msra.mxu0 %v605
    %822 = vmatprep.mubr.bf16.mxu0 %v277
    %823 = vmatmul.mubr.bf16.gmra.mrb[0].mxu0 %v275
    %v824 = vpop.f32.mrb[0].mxu0
    %v825 = vadd.f32 %v785, %v824
    %v826 = vpop.f32.mrb[0].mxu0
    %v827 = vpop.f32.mrb[0].mxu0
    %v828 = vpop.f32.mrb[0].mxu0
    %829 = vdwg.mxu0
    %v830 = vmul.f32 %v825, %v825
    %vm831 = vcmask 1041408
    %v832 = vsel %vm831, %v830, 0.0
    %833 = vadd.xlane.f32.xlu0 %v832
    %v834 = vpop.xlane.xlu0 %833
    %v835 = vadd.f32 %v834, 1e-12
    %v836 = vrsqrt.pop %v835
    %v837 = vmul.f32 %v825, %v836
    %v838 = vld [vmem:[#allocation10] sm:$0xff]
    %v839 = vld [vmem:[#allocation10 + $0x8] sm:$0xff]
    %v840 = vld [vmem:[#allocation10 + $0x10] sm:$0xff]
    %v841 = vld [vmem:[#allocation10 + $0x18] sm:$0xff]
    %v842 = vld [vmem:[#allocation10 + $0x20] sm:$0xff]
    %843 = vadd.xlane.f32.xlu0 %v838
    %v844 = vpop.xlane.xlu0 %843
    %845 = vadd.xlane.f32.xlu0 %v839
    %v846 = vpop.xlane.xlu0 %845
    %847 = vadd.xlane.f32.xlu0 %v840
    %v848 = vpop.xlane.xlu0 %847
    %849 = vadd.xlane.f32.xlu0 %v841
    %v850 = vpop.xlane.xlu0 %849
    %851 = vadd.xlane.f32.xlu0 %v842
    %v852 = vpop.xlane.xlu0 %851
    %v853 = vrcp.pop 128.0
    %v854 = vmul.f32 %v844, %v853
    %v855 = vmul.f32 %v846, %v853
    %v856 = vmul.f32 %v848, %v853
    %v857 = vmul.f32 %v850, %v853
    %v858 = vmul.f32 %v852, %v853
    %v859 = vsub.f32 %v838, %v854
    %v860 = vsub.f32 %v839, %v855
    %v861 = vsub.f32 %v840, %v856
    %v862 = vsub.f32 %v841, %v857
    %v863 = vsub.f32 %v842, %v858
    %v864 = vmul.f32 %v859, %v859
    %v865 = vmul.f32 %v860, %v860
    %v866 = vmul.f32 %v861, %v861
    %v867 = vmul.f32 %v862, %v862
    %v868 = vmul.f32 %v863, %v863
    %869 = vadd.xlane.f32.xlu0 %v864
    %v870 = vpop.xlane.xlu0 %869
    %871 = vadd.xlane.f32.xlu0 %v865
    %v872 = vpop.xlane.xlu0 %871
    %873 = vadd.xlane.f32.xlu0 %v866
    %v874 = vpop.xlane.xlu0 %873
    %875 = vadd.xlane.f32.xlu0 %v867
    %v876 = vpop.xlane.xlu0 %875
    %877 = vadd.xlane.f32.xlu0 %v868
    %v878 = vpop.xlane.xlu0 %877
    %v879 = vmul.f32 %v870, %v853
    %v880 = vmul.f32 %v872, %v853
    %v881 = vmul.f32 %v874, %v853
    %v882 = vmul.f32 %v876, %v853
    %v883 = vmul.f32 %v878, %v853
    %v884 = vadd.f32 %v879, 1e-05
    %v885 = vadd.f32 %v880, 1e-05
    %v886 = vadd.f32 %v881, 1e-05
    %v887 = vadd.f32 %v882, 1e-05
    %v888 = vadd.f32 %v883, 1e-05
    %v889 = vrsqrt.pop %v884
    %v890 = vrsqrt.pop %v885
    %v891 = vrsqrt.pop %v886
    %v892 = vrsqrt.pop %v887
    %v893 = vrsqrt.pop %v888
    %v894 = vmul.f32 %v859, %v889
    %v895 = vmul.f32 %v860, %v890
    %v896 = vmul.f32 %v861, %v891
    %v897 = vmul.f32 %v862, %v892
    %v898 = vmul.f32 %v863, %v893
    %v899 = vld [vmem:[%s5] sm:$0x1]
    %v901 = vlaneseq
    %v902 = vshrl.u32 %v901, 7
    %v903 = vsub.s32 0, %v902
    %v904 = vrot.slane %v899, %v903
    %v906 = vmul.f32 %v894, %v904
    %v907 = vmul.f32 %v895, %v904
    %v908 = vmul.f32 %v896, %v904
    %v909 = vmul.f32 %v897, %v904
    %v910 = vmul.f32 %v898, %v904
    %v911 = vld [vmem:[%s6] sm:$0x1]
    %v913 = vlaneseq
    %v914 = vshrl.u32 %v913, 7
    %v915 = vsub.s32 0, %v914
    %v916 = vrot.slane %v911, %v915
    %v918 = vadd.f32 %v906, %v916
    %v919 = vadd.f32 %v907, %v916
    %v920 = vadd.f32 %v908, %v916
    %v921 = vadd.f32 %v909, %v916
    %v922 = vadd.f32 %v910, %v916
    %v923 = vpack.c.bf16 %v919, %v918
    %v924 = vpack.c.bf16 %v921, %v920
    %v925 = vpack.c.bf16 %v922, %v922
    %v926 = vld [vmem:[#allocation11] sm:$0xf]
    %v927 = vld [vmem:[#allocation11 + $0x4] sm:$0xf]
    %v928 = vld [vmem:[#allocation11 + $0x8] sm:$0xf]
    %v929 = vld [vmem:[#allocation11 + $0xc] sm:$0xf]
    %v930 = vld [vmem:[#allocation11 + $0x10] sm:$0xf]
    %v931 = vld [vmem:[#allocation11 + $0x14] sm:$0xf]
    %v932 = vld [vmem:[#allocation11 + $0x18] sm:$0xf]
    %v933 = vld [vmem:[#allocation11 + $0x1c] sm:$0xf]
    %v934 = vld [vmem:[#allocation11 + $0x20] sm:$0xf]
    %v935 = vld [vmem:[#allocation11 + $0x24] sm:$0xf]
    %v936 = vld [vmem:[#allocation11 + $0x28] sm:$0xf]
    %v937 = vld [vmem:[#allocation11 + $0x2c] sm:$0xf]
    %v938 = vld [vmem:[#allocation11 + $0x30] sm:$0xf]
    %v939 = vld [vmem:[#allocation11 + $0x34] sm:$0xf]
    %v940 = vld [vmem:[#allocation11 + $0x38] sm:$0xf]
    %v941 = vld [vmem:[#allocation11 + $0x3c] sm:$0xf]
    %v958 = vunpack.c.l.b16 %v926
    %v959 = vunpack.c.l.b16 %v927
    %v960 = vunpack.c.l.b16 %v928
    %v961 = vunpack.c.l.b16 %v929
    %v962 = vunpack.c.l.b16 %v930
    %v963 = vunpack.c.l.b16 %v931
    %v964 = vunpack.c.l.b16 %v932
    %v965 = vunpack.c.l.b16 %v933
    %v966 = vunpack.c.l.b16 %v934
    %v967 = vunpack.c.l.b16 %v935
    %v968 = vunpack.c.l.b16 %v936
    %v969 = vunpack.c.l.b16 %v937
    %v970 = vunpack.c.l.b16 %v938
    %v971 = vunpack.c.l.b16 %v939
    %v972 = vunpack.c.l.b16 %v940
    %v973 = vunpack.c.l.b16 %v941
    %v974 = vpack.c.b16 %v959, %v958
    %v975 = vpack.c.b16 %v961, %v960
    %v976 = vpack.c.b16 %v963, %v962
    %v977 = vpack.c.b16 %v965, %v964
    %v978 = vpack.c.b16 %v967, %v966
    %v979 = vpack.c.b16 %v969, %v968
    %v980 = vpack.c.b16 %v971, %v970
    %v981 = vpack.c.b16 %v973, %v972
    %990 = vmatprep.subr.bf16.mxu0 0
    %991 = vmatpush1.bf16.msra.mxu0 %v974
    %992 = vmatprep.subr.bf16.mxu0 0
    %993 = vmatpush1.bf16.msra.mxu0 %v975
    %994 = vmatprep.subr.bf16.mxu0 0
    %995 = vmatpush1.bf16.msra.mxu0 %v976
    %996 = vmatprep.subr.bf16.mxu0 0
    %997 = vmatpush1.bf16.msra.mxu0 %v977
    %998 = vmatprep.subr.bf16.mxu0 0
    %999 = vmatpush1.bf16.msra.mxu0 %v978
    %1000 = vmatprep.subr.bf16.mxu0 0
    %1001 = vmatpush1.bf16.msra.mxu0 %v979
    %1002 = vmatprep.subr.bf16.mxu0 0
    %1003 = vmatpush1.bf16.msra.mxu0 %v980
    %1004 = vmatprep.subr.bf16.mxu0 0
    %1005 = vmatpush1.bf16.msra.mxu0 %v981
    %1006 = vmatprep.subr.bf16.mxu0 0
    %1007 = vmatpush1.bf16.msra.mxu0 0
    %1008 = vmatprep.subr.bf16.mxu0 0
    %1009 = vmatpush1.bf16.msra.mxu0 0
    %1010 = vmatprep.subr.bf16.mxu0 0
    %1011 = vmatpush1.bf16.msra.mxu0 0
    %1012 = vmatprep.subr.bf16.mxu0 0
    %1013 = vmatpush1.bf16.msra.mxu0 0
    %1014 = vmatprep.subr.bf16.mxu0 0
    %1015 = vmatpush1.bf16.msra.mxu0 0
    %1016 = vmatprep.subr.bf16.mxu0 0
    %1017 = vmatpush1.bf16.msra.mxu0 0
    %1018 = vmatprep.subr.bf16.mxu0 0
    %1019 = vmatpush1.bf16.msra.mxu0 0
    %1020 = vmatprep.subr.bf16.mxu0 0
    %1021 = vmatpush1.bf16.msra.mxu0 0
    %1022 = vmatprep.mubr.bf16.mxu0 0
    %1023 = vmatmul.mubr.bf16.gmra.mrb[0].mxu0 %v923
    %v1024 = vpop.f32.mrb[0].mxu0
    %v1025 = vadd.f32 0.0, %v1024
    %v1026 = vpop.f32.mrb[0].mxu0
    %v1027 = vpop.f32.mrb[0].mxu0
    %v1028 = vadd.f32 0.0, %v1027
    %v1029 = vpop.f32.mrb[0].mxu0
    %1030 = vmatprep.mubr.bf16.mxu0 0
    %1031 = vmatmul.mubr.bf16.gmra.mrb[0].mxu0 %v924
    %v1032 = vpop.f32.mrb[0].mxu0
    %v1033 = vadd.f32 0.0, %v1032
    %v1034 = vpop.f32.mrb[0].mxu0
    %v1035 = vpop.f32.mrb[0].mxu0
    %v1036 = vadd.f32 0.0, %v1035
    %v1037 = vpop.f32.mrb[0].mxu0
    %1038 = vmatprep.mubr.bf16.mxu0 0
    %1039 = vmatmul.mubr.bf16.gmra.mrb[0].mxu0 %v925
    %v1040 = vpop.f32.mrb[0].mxu0
    %v1041 = vadd.f32 0.0, %v1040
    %v1042 = vpop.f32.mrb[0].mxu0
    %v1043 = vpop.f32.mrb[0].mxu0
    %v1044 = vpop.f32.mrb[0].mxu0
    %1045 = vdwg.mxu0
    %v1046 = vmul.f32 %v1025, %v1025
    %v1047 = vmul.f32 %v1028, %v1028
    %v1048 = vmul.f32 %v1033, %v1033
    %v1049 = vmul.f32 %v1036, %v1036
    %v1050 = vmul.f32 %v1041, %v1041
    %1051 = vadd.xlane.f32.xlu0 %v1046
    %v1052 = vpop.xlane.xlu0 %1051
    %1053 = vadd.xlane.f32.xlu0 %v1047
    %v1054 = vpop.xlane.xlu0 %1053
    %1055 = vadd.xlane.f32.xlu0 %v1048
    %v1056 = vpop.xlane.xlu0 %1055
    %1057 = vadd.xlane.f32.xlu0 %v1049
    %v1058 = vpop.xlane.xlu0 %1057
    %1059 = vadd.xlane.f32.xlu0 %v1050
    %v1060 = vpop.xlane.xlu0 %1059
    %v1061 = vadd.f32 %v1052, 1e-12
    %v1062 = vadd.f32 %v1054, 1e-12
    %v1063 = vadd.f32 %v1056, 1e-12
    %v1064 = vadd.f32 %v1058, 1e-12
    %v1065 = vadd.f32 %v1060, 1e-12
    %v1066 = vrsqrt.pop %v1061
    %v1067 = vrsqrt.pop %v1062
    %v1068 = vrsqrt.pop %v1063
    %v1069 = vrsqrt.pop %v1064
    %v1070 = vrsqrt.pop %v1065
    %v1071 = vmul.f32 %v1025, %v1066
    %v1072 = vmul.f32 %v1028, %v1067
    %v1073 = vmul.f32 %v1033, %v1068
    %v1074 = vmul.f32 %v1036, %v1069
    %v1075 = vmul.f32 %v1041, %v1070
    %v1076 = vrot.slane %v1071, 4
    %v1077 = vadd.f32 %v1071, %v1076
    %v1078 = vrot.slane %v1077, 2
    %v1079 = vadd.f32 %v1077, %v1078
    %v1080 = vrot.slane %v1079, 1
    %v1081 = vadd.f32 %v1079, %v1080
    %v1082 = vrot.slane %v1072, 4
    %v1083 = vadd.f32 %v1072, %v1082
    %v1084 = vrot.slane %v1083, 2
    %v1085 = vadd.f32 %v1083, %v1084
    %v1086 = vrot.slane %v1085, 1
    %v1087 = vadd.f32 %v1085, %v1086
    %v1088 = vrot.slane %v1073, 4
    %v1089 = vadd.f32 %v1073, %v1088
    %v1090 = vrot.slane %v1089, 2
    %v1091 = vadd.f32 %v1089, %v1090
    %v1092 = vrot.slane %v1091, 1
    %v1093 = vadd.f32 %v1091, %v1092
    %v1094 = vrot.slane %v1074, 4
    %v1095 = vadd.f32 %v1074, %v1094
    %v1096 = vrot.slane %v1095, 2
    %v1097 = vadd.f32 %v1095, %v1096
    %v1098 = vrot.slane %v1097, 1
    %v1099 = vadd.f32 %v1097, %v1098
    %v1100 = vrcp.pop 8.0
    %v1101 = vmul.f32 %v1081, %v1100
    %v1102 = vmul.f32 %v1087, %v1100
    %v1103 = vmul.f32 %v1093, %v1100
    %v1104 = vmul.f32 %v1099, %v1100
    %v1105 = vsub.f32 %v1071, %v1101
    %v1106 = vsub.f32 %v1072, %v1102
    %v1107 = vsub.f32 %v1073, %v1103
    %v1108 = vsub.f32 %v1074, %v1104
    %v1109 = vcombine.low %v1105, %v1107
    %v1110 = vcombine.high %v1105, %v1107
    %v1112 = vunpack.c.l.s4 1983009808
    %v1113 = vunpack.c.0.s8 %v1112
    %v1114 = vlaneseq
    %v1115 = vshrl.u32 %v1114, 7
    %v1116 = vsub.s32 %v1113, %v1115
    %v1117 = vrot.slane %v1109, %v1116
    %v1119 = vunpack.c.l.s4 1983009808
    %v1120 = vunpack.c.0.s8 %v1119
    %v1121 = vlaneseq
    %v1122 = vshrl.u32 %v1121, 7
    %v1123 = vsub.s32 %v1120, %v1122
    %v1124 = vrot.slane %v1110, %v1123
    %v1125 = vcombine.low %v1106, %v1108
    %v1126 = vcombine.high %v1106, %v1108
    %v1128 = vunpack.c.l.s4 1983009808
    %v1129 = vunpack.c.0.s8 %v1128
    %v1130 = vlaneseq
    %v1131 = vshrl.u32 %v1130, 7
    %v1132 = vsub.s32 %v1129, %v1131
    %v1133 = vrot.slane %v1125, %v1132
    %v1135 = vunpack.c.l.s4 1983009808
    %v1136 = vunpack.c.0.s8 %v1135
    %v1137 = vlaneseq
    %v1138 = vshrl.u32 %v1137, 7
    %v1139 = vsub.s32 %v1136, %v1138
    %v1140 = vrot.slane %v1126, %v1139
    %v1141 = vcombine.low %v1117, %v1133
    %v1142 = vcombine.high %v1117, %v1133
    %v1144 = vunpack.c.l.s4 1934713408
    %v1145 = vunpack.c.0.s8 %v1144
    %v1146 = vlaneseq
    %v1147 = vshrl.u32 %v1146, 7
    %v1148 = vsub.s32 %v1145, %v1147
    %v1149 = vrot.slane %v1141, %v1148
    %v1151 = vunpack.c.l.s4 1934713408
    %v1152 = vunpack.c.0.s8 %v1151
    %v1153 = vlaneseq
    %v1154 = vshrl.u32 %v1153, 7
    %v1155 = vsub.s32 %v1152, %v1154
    %v1156 = vrot.slane %v1142, %v1155
    %v1157 = vcombine.low %v1124, %v1140
    %v1158 = vcombine.high %v1124, %v1140
    %v1160 = vunpack.c.l.s4 1934713408
    %v1161 = vunpack.c.0.s8 %v1160
    %v1162 = vlaneseq
    %v1163 = vshrl.u32 %v1162, 7
    %v1164 = vsub.s32 %v1161, %v1163
    %v1165 = vrot.slane %v1157, %v1164
    %v1167 = vunpack.c.l.s4 1934713408
    %v1168 = vunpack.c.0.s8 %v1167
    %v1169 = vlaneseq
    %v1170 = vshrl.u32 %v1169, 7
    %v1171 = vsub.s32 %v1168, %v1170
    %v1172 = vrot.slane %v1158, %v1171
    %v1173 = vcombine.high %v1149, 0.0
    %v1174 = vcombine.high %v1156, 0.0
    %v1175 = vcombine.high %v1165, 0.0
    %v1176 = vcombine.high %v1172, 0.0
    %v1177 = vpack.c.bf16 %v837, %v837
    %v1178 = vpack.c.bf16 %v1101, %v1101
    %v1179 = vpack.c.bf16 %v1102, %v1102
    %v1180 = vpack.c.bf16 %v1103, %v1103
    %v1181 = vpack.c.bf16 %v1104, %v1104
    %v1186 = vunpack.c.l.b16 %v1178
    %v1187 = vunpack.c.l.b16 %v1179
    %v1188 = vunpack.c.l.b16 %v1180
    %v1189 = vunpack.c.l.b16 %v1181
    %vm1190 = vcmask 1041409
    %v1191 = vsel %vm1190, %v1187, %v1186
    %vm1192 = vcmask 1042434
    %v1193 = vsel %vm1192, %v1188, %v1191
    %vm1194 = vcmask 1043459
    %v1195 = vsel %vm1194, %v1189, %v1193
    %v1196 = vpack.c.b16 %v1195, %v1195
    %1198 = vmatprep.subr.bf16.mxu0 0
    %1199 = vmatpush1.bf16.xpose.msra.mxu0 %v1196
    %1200 = vmatprep.subr.bf16.mxu0 0
    %1201 = vmatpush1.bf16.xpose.msra.mxu0 0
    %1202 = vmatprep.subr.bf16.mxu0 0
    %1203 = vmatpush1.bf16.xpose.msra.mxu0 0
    %1204 = vmatprep.subr.bf16.mxu0 0
    %1205 = vmatpush1.bf16.xpose.msra.mxu0 0
    %1206 = vmatprep.subr.bf16.mxu0 0
    %1207 = vmatpush1.bf16.xpose.msra.mxu0 0
    %1208 = vmatprep.subr.bf16.mxu0 0
    %1209 = vmatpush1.bf16.xpose.msra.mxu0 0
    %1210 = vmatprep.subr.bf16.mxu0 0
    %1211 = vmatpush1.bf16.xpose.msra.mxu0 0
    %1212 = vmatprep.subr.bf16.mxu0 0
    %1213 = vmatpush1.bf16.xpose.msra.mxu0 0
    %1214 = vmatprep.subr.bf16.mxu0 0
    %1215 = vmatpush1.bf16.xpose.msra.mxu0 0
    %1216 = vmatprep.subr.bf16.mxu0 0
    %1217 = vmatpush1.bf16.xpose.msra.mxu0 0
    %1218 = vmatprep.subr.bf16.mxu0 0
    %1219 = vmatpush1.bf16.xpose.msra.mxu0 0
    %1220 = vmatprep.subr.bf16.mxu0 0
    %1221 = vmatpush1.bf16.xpose.msra.mxu0 0
    %1222 = vmatprep.subr.bf16.mxu0 0
    %1223 = vmatpush1.bf16.xpose.msra.mxu0 0
    %1224 = vmatprep.subr.bf16.mxu0 0
    %1225 = vmatpush1.bf16.xpose.msra.mxu0 0
    %1226 = vmatprep.subr.bf16.mxu0 0
    %1227 = vmatpush1.bf16.xpose.msra.mxu0 0
    %1228 = vmatprep.subr.bf16.mxu0 0
    %1229 = vmatpush1.bf16.xpose.msra.mxu0 0
    %1230 = vmatprep.mubr.bf16.mxu0 0
    %1231 = vmatmul.mubr.bf16.gmra.mrb[0].mxu0 %v1177
    %v1232 = vpop.f32.mrb[0].mxu0
    %v1233 = vadd.f32 0.0, %v1232
    %v1234 = vpop.f32.mrb[0].mxu0
    %v1235 = vpop.f32.mrb[0].mxu0
    %v1236 = vpop.f32.mrb[0].mxu0
    %1237 = vdwg.mxu0
    %v1238 = vstv %s98
    %v1239 = vmul.f32 %v1238, %v1233
    %v1240 = vmul.f32 %v837, %v837
    %v1241 = vlaneseq
    %v1242 = vand.u32 %v1241, 127
    %v1243 = vlaneseq
    %v1244 = vshrl.u32 %v1243, 7
    %vm1245 = vcmp.eq.s32.totalorder %v1244, %v1242
    %v1246 = vsel %vm1245, 1, 0
    %v1247 = vcvt.s32.f32 %v1246
    %s1248 = sld [smem:[#allocation3]]
    %v1249 = vstv %s1248
    %vm1250 = vcmp.eq.s32.totalorder %v1242, %v1249
    %v1251 = vsel %vm1250, 1, 0
    %v1252 = vcvt.s32.f32 %v1251
    %vm1253 = vcmp.eq.s32.totalorder %v1244, %v1249
    %v1254 = vsel %vm1253, 1, 0
    %v1255 = vcvt.s32.f32 %v1254
    %v1256 = vlaneseq
    %v1257 = vshrl.u32 %v1256, 7
    %v1258 = vsub.s32 0, %v1257
    %v1259 = vrot.slane %v1240, %v1258
    %v1260 = vmul.f32 %v1105, %v1259
    %v1261 = vmul.f32 %v1106, %v1259
    %v1262 = vmul.f32 %v1107, %v1259
    %v1263 = vmul.f32 %v1108, %v1259
    %v1264 = vcombine.low %v1260, %v1262
    %v1265 = vcombine.high %v1260, %v1262
    %v1267 = vunpack.c.l.s4 1983009808
    %v1268 = vunpack.c.0.s8 %v1267
    %v1269 = vlaneseq
    %v1270 = vshrl.u32 %v1269, 7
    %v1271 = vsub.s32 %v1268, %v1270
    %v1272 = vrot.slane %v1264, %v1271
    %v1274 = vunpack.c.l.s4 1983009808
    %v1275 = vunpack.c.0.s8 %v1274
    %v1276 = vlaneseq
    %v1277 = vshrl.u32 %v1276, 7
    %v1278 = vsub.s32 %v1275, %v1277
    %v1279 = vrot.slane %v1265, %v1278
    %v1280 = vcombine.low %v1261, %v1263
    %v1281 = vcombine.high %v1261, %v1263
    %v1283 = vunpack.c.l.s4 1983009808
    %v1284 = vunpack.c.0.s8 %v1283
    %v1285 = vlaneseq
    %v1286 = vshrl.u32 %v1285, 7
    %v1287 = vsub.s32 %v1284, %v1286
    %v1288 = vrot.slane %v1280, %v1287
    %v1290 = vunpack.c.l.s4 1983009808
    %v1291 = vunpack.c.0.s8 %v1290
    %v1292 = vlaneseq
    %v1293 = vshrl.u32 %v1292, 7
    %v1294 = vsub.s32 %v1291, %v1293
    %v1295 = vrot.slane %v1281, %v1294
    %v1296 = vcombine.low %v1272, %v1288
    %v1297 = vcombine.high %v1272, %v1288
    %v1299 = vunpack.c.l.s4 1934713408
    %v1300 = vunpack.c.0.s8 %v1299
    %v1301 = vlaneseq
    %v1302 = vshrl.u32 %v1301, 7
    %v1303 = vsub.s32 %v1300, %v1302
    %v1304 = vrot.slane %v1296, %v1303
    %v1306 = vunpack.c.l.s4 1934713408
    %v1307 = vunpack.c.0.s8 %v1306
    %v1308 = vlaneseq
    %v1309 = vshrl.u32 %v1308, 7
    %v1310 = vsub.s32 %v1307, %v1309
    %v1311 = vrot.slane %v1297, %v1310
    %v1312 = vcombine.low %v1279, %v1295
    %v1313 = vcombine.high %v1279, %v1295
    %v1315 = vunpack.c.l.s4 1934713408
    %v1316 = vunpack.c.0.s8 %v1315
    %v1317 = vlaneseq
    %v1318 = vshrl.u32 %v1317, 7
    %v1319 = vsub.s32 %v1316, %v1318
    %v1320 = vrot.slane %v1312, %v1319
    %v1322 = vunpack.c.l.s4 1934713408
    %v1323 = vunpack.c.0.s8 %v1322
    %v1324 = vlaneseq
    %v1325 = vshrl.u32 %v1324, 7
    %v1326 = vsub.s32 %v1323, %v1325
    %v1327 = vrot.slane %v1313, %v1326
    %v1328 = vcombine.high %v1304, 0.0
    %v1329 = vcombine.high %v1311, 0.0
    %v1330 = vcombine.high %v1320, 0.0
    %v1331 = vcombine.high %v1327, 0.0
    %1332 = vmatprep.subr.mxu0 %v1173
    %1333 = vmatpush1.xpose.msra.mxu0 %v1149
    %1334 = vmatprep.subr.mxu0 0.0
    %1335 = vmatpush1.xpose.msra.mxu0 0.0
    %1336 = vmatprep.subr.mxu0 0.0
    %1337 = vmatpush1.xpose.msra.mxu0 0.0
    %1338 = vmatprep.subr.mxu0 0.0
    %1339 = vmatpush1.xpose.msra.mxu0 0.0
    %1340 = vmatprep.subr.mxu0 0.0
    %1341 = vmatpush1.xpose.msra.mxu0 0.0
    %1342 = vmatprep.subr.mxu0 0.0
    %1343 = vmatpush1.xpose.msra.mxu0 0.0
    %1344 = vmatprep.subr.mxu0 0.0
    %1345 = vmatpush1.xpose.msra.mxu0 0.0
    %1346 = vmatprep.subr.mxu0 0.0
    %1347 = vmatpush1.xpose.msra.mxu0 0.0
    %1348 = vmatprep.subr.mxu0 0.0
    %1349 = vmatpush1.xpose.msra.mxu0 0.0
    %1350 = vmatprep.subr.mxu0 0.0
    %1351 = vmatpush1.xpose.msra.mxu0 0.0
    %1352 = vmatprep.subr.mxu0 0.0
    %1353 = vmatpush1.xpose.msra.mxu0 0.0
    %1354 = vmatprep.subr.mxu0 0.0
    %1355 = vmatpush1.xpose.msra.mxu0 0.0
    %1356 = vmatprep.subr.mxu0 0.0
    %1357 = vmatpush1.xpose.msra.mxu0 0.0
    %1358 = vmatprep.subr.mxu0 0.0
    %1359 = vmatpush1.xpose.msra.mxu0 0.0
    %1360 = vmatprep.subr.mxu0 0.0
    %1361 = vmatpush1.xpose.msra.mxu0 0.0
    %1362 = vmatprep.subr.mxu0 0.0
    %1363 = vmatpush1.xpose.msra.mxu0 0.0
    %1364 = vmatprep.subr.mxu0 0.0
    %1365 = vmatpush1.xpose.msra.mxu0 0.0
    %1366 = vmatprep.subr.mxu0 0.0
    %1367 = vmatpush1.xpose.msra.mxu0 0.0
    %1368 = vmatprep.subr.mxu0 0.0
    %1369 = vmatpush1.xpose.msra.mxu0 0.0
    %1370 = vmatprep.subr.mxu0 0.0
    %1371 = vmatpush1.xpose.msra.mxu0 0.0
    %1372 = vmatprep.subr.mxu0 0.0
    %1373 = vmatpush1.xpose.msra.mxu0 0.0
    %1374 = vmatprep.subr.mxu0 0.0
    %1375 = vmatpush1.xpose.msra.mxu0 0.0
    %1376 = vmatprep.subr.mxu0 0.0
    %1377 = vmatpush1.xpose.msra.mxu0 0.0
    %1378 = vmatprep.subr.mxu0 0.0
    %1379 = vmatpush1.xpose.msra.mxu0 0.0
    %1380 = vmatprep.subr.mxu0 0.0
    %1381 = vmatpush1.xpose.msra.mxu0 0.0
    %1382 = vmatprep.subr.mxu0 0.0
    %1383 = vmatpush1.xpose.msra.mxu0 0.0
    %1384 = vmatprep.subr.mxu0 0.0
    %1385 = vmatpush1.xpose.msra.mxu0 0.0
    %1386 = vmatprep.subr.mxu0 0.0
    %1387 = vmatpush1.xpose.msra.mxu0 0.0
    %1388 = vmatprep.subr.mxu0 0.0
    %1389 = vmatpush1.xpose.msra.mxu0 0.0
    %1390 = vmatprep.subr.mxu0 0.0
    %1391 = vmatpush1.xpose.msra.mxu0 0.0
    %1392 = vmatprep.subr.mxu0 0.0
    %1393 = vmatpush1.xpose.msra.mxu0 0.0
    %1394 = vmatprep.subr.mxu0 0.0
    %1395 = vmatpush1.xpose.msra.mxu0 0.0
    %1396 = vmatprep.mubr.f32.mxu0 %v1328
    %1397 = vmatmul.mubr.f32.gmra.mrb[0].mxu0 %v1304
    %v1398 = vpop.f32.mrb[0].mxu0
    %v1399 = vadd.f32 0.0, %v1398
    %v1400 = vpop.f32.mrb[0].mxu0
    %1401 = vdwg.mxu0
    %1402 = vmatprep.subr.mxu0 %v1174
    %1403 = vmatpush1.xpose.msra.mxu0 %v1156
    %1404 = vmatprep.subr.mxu0 0.0
    %1405 = vmatpush1.xpose.msra.mxu0 0.0
    %1406 = vmatprep.subr.mxu0 0.0
    %1407 = vmatpush1.xpose.msra.mxu0 0.0
    %1408 = vmatprep.subr.mxu0 0.0
    %1409 = vmatpush1.xpose.msra.mxu0 0.0
    %1410 = vmatprep.subr.mxu0 0.0
    %1411 = vmatpush1.xpose.msra.mxu0 0.0
    %1412 = vmatprep.subr.mxu0 0.0
    %1413 = vmatpush1.xpose.msra.mxu0 0.0
    %1414 = vmatprep.subr.mxu0 0.0
    %1415 = vmatpush1.xpose.msra.mxu0 0.0
    %1416 = vmatprep.subr.mxu0 0.0
    %1417 = vmatpush1.xpose.msra.mxu0 0.0
    %1418 = vmatprep.subr.mxu0 0.0
    %1419 = vmatpush1.xpose.msra.mxu0 0.0
    %1420 = vmatprep.subr.mxu0 0.0
    %1421 = vmatpush1.xpose.msra.mxu0 0.0
    %1422 = vmatprep.subr.mxu0 0.0
    %1423 = vmatpush1.xpose.msra.mxu0 0.0
    %1424 = vmatprep.subr.mxu0 0.0
    %1425 = vmatpush1.xpose.msra.mxu0 0.0
    %1426 = vmatprep.subr.mxu0 0.0
    %1427 = vmatpush1.xpose.msra.mxu0 0.0
    %1428 = vmatprep.subr.mxu0 0.0
    %1429 = vmatpush1.xpose.msra.mxu0 0.0
    %1430 = vmatprep.subr.mxu0 0.0
    %1431 = vmatpush1.xpose.msra.mxu0 0.0
    %1432 = vmatprep.subr.mxu0 0.0
    %1433 = vmatpush1.xpose.msra.mxu0 0.0
    %1434 = vmatprep.subr.mxu0 0.0
    %1435 = vmatpush1.xpose.msra.mxu0 0.0
    %1436 = vmatprep.subr.mxu0 0.0
    %1437 = vmatpush1.xpose.msra.mxu0 0.0
    %1438 = vmatprep.subr.mxu0 0.0
    %1439 = vmatpush1.xpose.msra.mxu0 0.0
    %1440 = vmatprep.subr.mxu0 0.0
    %1441 = vmatpush1.xpose.msra.mxu0 0.0
    %1442 = vmatprep.subr.mxu0 0.0
    %1443 = vmatpush1.xpose.msra.mxu0 0.0
    %1444 = vmatprep.subr.mxu0 0.0
    %1445 = vmatpush1.xpose.msra.mxu0 0.0
    %1446 = vmatprep.subr.mxu0 0.0
    %1447 = vmatpush1.xpose.msra.mxu0 0.0
    %1448 = vmatprep.subr.mxu0 0.0
    %1449 = vmatpush1.xpose.msra.mxu0 0.0
    %1450 = vmatprep.subr.mxu0 0.0
    %1451 = vmatpush1.xpose.msra.mxu0 0.0
    %1452 = vmatprep.subr.mxu0 0.0
    %1453 = vmatpush1.xpose.msra.mxu0 0.0
    %1454 = vmatprep.subr.mxu0 0.0
    %1455 = vmatpush1.xpose.msra.mxu0 0.0
    %1456 = vmatprep.subr.mxu0 0.0
    %1457 = vmatpush1.xpose.msra.mxu0 0.0
    %1458 = vmatprep.subr.mxu0 0.0
    %1459 = vmatpush1.xpose.msra.mxu0 0.0
    %1460 = vmatprep.subr.mxu0 0.0
    %1461 = vmatpush1.xpose.msra.mxu0 0.0
    %1462 = vmatprep.subr.mxu0 0.0
    %1463 = vmatpush1.xpose.msra.mxu0 0.0
    %1464 = vmatprep.subr.mxu0 0.0
    %1465 = vmatpush1.xpose.msra.mxu0 0.0
    %1466 = vmatprep.mubr.f32.mxu0 %v1329
    %1467 = vmatmul.mubr.f32.gmra.mrb[0].mxu0 %v1311
    %v1468 = vpop.f32.mrb[0].mxu0
    %v1469 = vadd.f32 %v1399, %v1468
    %v1470 = vpop.f32.mrb[0].mxu0
    %1471 = vdwg.mxu0
    %1472 = vmatprep.subr.mxu0 %v1175
    %1473 = vmatpush1.xpose.msra.mxu0 %v1165
    %1474 = vmatprep.subr.mxu0 0.0
    %1475 = vmatpush1.xpose.msra.mxu0 0.0
    %1476 = vmatprep.subr.mxu0 0.0
    %1477 = vmatpush1.xpose.msra.mxu0 0.0
    %1478 = vmatprep.subr.mxu0 0.0
    %1479 = vmatpush1.xpose.msra.mxu0 0.0
    %1480 = vmatprep.subr.mxu0 0.0
    %1481 = vmatpush1.xpose.msra.mxu0 0.0
    %1482 = vmatprep.subr.mxu0 0.0
    %1483 = vmatpush1.xpose.msra.mxu0 0.0
    %1484 = vmatprep.subr.mxu0 0.0
    %1485 = vmatpush1.xpose.msra.mxu0 0.0
    %1486 = vmatprep.subr.mxu0 0.0
    %1487 = vmatpush1.xpose.msra.mxu0 0.0
    %1488 = vmatprep.subr.mxu0 0.0
    %1489 = vmatpush1.xpose.msra.mxu0 0.0
    %1490 = vmatprep.subr.mxu0 0.0
    %1491 = vmatpush1.xpose.msra.mxu0 0.0
    %1492 = vmatprep.subr.mxu0 0.0
    %1493 = vmatpush1.xpose.msra.mxu0 0.0
    %1494 = vmatprep.subr.mxu0 0.0
    %1495 = vmatpush1.xpose.msra.mxu0 0.0
    %1496 = vmatprep.subr.mxu0 0.0
    %1497 = vmatpush1.xpose.msra.mxu0 0.0
    %1498 = vmatprep.subr.mxu0 0.0
    %1499 = vmatpush1.xpose.msra.mxu0 0.0
    %1500 = vmatprep.subr.mxu0 0.0
    %1501 = vmatpush1.xpose.msra.mxu0 0.0
    %1502 = vmatprep.subr.mxu0 0.0
    %1503 = vmatpush1.xpose.msra.mxu0 0.0
    %1504 = vmatprep.subr.mxu0 0.0
    %1505 = vmatpush1.xpose.msra.mxu0 0.0
    %1506 = vmatprep.subr.mxu0 0.0
    %1507 = vmatpush1.xpose.msra.mxu0 0.0
    %1508 = vmatprep.subr.mxu0 0.0
    %1509 = vmatpush1.xpose.msra.mxu0 0.0
    %1510 = vmatprep.subr.mxu0 0.0
    %1511 = vmatpush1.xpose.msra.mxu0 0.0
    %1512 = vmatprep.subr.mxu0 0.0
    %1513 = vmatpush1.xpose.msra.mxu0 0.0
    %1514 = vmatprep.subr.mxu0 0.0
    %1515 = vmatpush1.xpose.msra.mxu0 0.0
    %1516 = vmatprep.subr.mxu0 0.0
    %1517 = vmatpush1.xpose.msra.mxu0 0.0
    %1518 = vmatprep.subr.mxu0 0.0
    %1519 = vmatpush1.xpose.msra.mxu0 0.0
    %1520 = vmatprep.subr.mxu0 0.0
    %1521 = vmatpush1.xpose.msra.mxu0 0.0
    %1522 = vmatprep.subr.mxu0 0.0
    %1523 = vmatpush1.xpose.msra.mxu0 0.0
    %1524 = vmatprep.subr.mxu0 0.0
    %1525 = vmatpush1.xpose.msra.mxu0 0.0
    %1526 = vmatprep.subr.mxu0 0.0
    %1527 = vmatpush1.xpose.msra.mxu0 0.0
    %1528 = vmatprep.subr.mxu0 0.0
    %1529 = vmatpush1.xpose.msra.mxu0 0.0
    %1530 = vmatprep.subr.mxu0 0.0
    %1531 = vmatpush1.xpose.msra.mxu0 0.0
    %1532 = vmatprep.subr.mxu0 0.0
    %1533 = vmatpush1.xpose.msra.mxu0 0.0
    %1534 = vmatprep.subr.mxu0 0.0
    %1535 = vmatpush1.xpose.msra.mxu0 0.0
    %1536 = vmatprep.mubr.f32.mxu0 %v1330
    %1537 = vmatmul.mubr.f32.gmra.mrb[0].mxu0 %v1320
    %v1538 = vpop.f32.mrb[0].mxu0
    %v1539 = vadd.f32 %v1469, %v1538
    %v1540 = vpop.f32.mrb[0].mxu0
    %1541 = vdwg.mxu0
    %1542 = vmatprep.subr.mxu0 %v1176
    %1543 = vmatpush1.xpose.msra.mxu0 %v1172
    %1544 = vmatprep.subr.mxu0 0.0
    %1545 = vmatpush1.xpose.msra.mxu0 0.0
    %1546 = vmatprep.subr.mxu0 0.0
    %1547 = vmatpush1.xpose.msra.mxu0 0.0
    %1548 = vmatprep.subr.mxu0 0.0
    %1549 = vmatpush1.xpose.msra.mxu0 0.0
    %1550 = vmatprep.subr.mxu0 0.0
    %1551 = vmatpush1.xpose.msra.mxu0 0.0
    %1552 = vmatprep.subr.mxu0 0.0
    %1553 = vmatpush1.xpose.msra.mxu0 0.0
    %1554 = vmatprep.subr.mxu0 0.0
    %1555 = vmatpush1.xpose.msra.mxu0 0.0
    %1556 = vmatprep.subr.mxu0 0.0
    %1557 = vmatpush1.xpose.msra.mxu0 0.0
    %1558 = vmatprep.subr.mxu0 0.0
    %1559 = vmatpush1.xpose.msra.mxu0 0.0
    %1560 = vmatprep.subr.mxu0 0.0
    %1561 = vmatpush1.xpose.msra.mxu0 0.0
    %1562 = vmatprep.subr.mxu0 0.0
    %1563 = vmatpush1.xpose.msra.mxu0 0.0
    %1564 = vmatprep.subr.mxu0 0.0
    %1565 = vmatpush1.xpose.msra.mxu0 0.0
    %1566 = vmatprep.subr.mxu0 0.0
    %1567 = vmatpush1.xpose.msra.mxu0 0.0
    %1568 = vmatprep.subr.mxu0 0.0
    %1569 = vmatpush1.xpose.msra.mxu0 0.0
    %1570 = vmatprep.subr.mxu0 0.0
    %1571 = vmatpush1.xpose.msra.mxu0 0.0
    %1572 = vmatprep.subr.mxu0 0.0
    %1573 = vmatpush1.xpose.msra.mxu0 0.0
    %1574 = vmatprep.subr.mxu0 0.0
    %1575 = vmatpush1.xpose.msra.mxu0 0.0
    %1576 = vmatprep.subr.mxu0 0.0
    %1577 = vmatpush1.xpose.msra.mxu0 0.0
    %1578 = vmatprep.subr.mxu0 0.0
    %1579 = vmatpush1.xpose.msra.mxu0 0.0
    %1580 = vmatprep.subr.mxu0 0.0
    %1581 = vmatpush1.xpose.msra.mxu0 0.0
    %1582 = vmatprep.subr.mxu0 0.0
    %1583 = vmatpush1.xpose.msra.mxu0 0.0
    %1584 = vmatprep.subr.mxu0 0.0
    %1585 = vmatpush1.xpose.msra.mxu0 0.0
    %1586 = vmatprep.subr.mxu0 0.0
    %1587 = vmatpush1.xpose.msra.mxu0 0.0
    %1588 = vmatprep.subr.mxu0 0.0
    %1589 = vmatpush1.xpose.msra.mxu0 0.0
    %1590 = vmatprep.subr.mxu0 0.0
    %1591 = vmatpush1.xpose.msra.mxu0 0.0
    %1592 = vmatprep.subr.mxu0 0.0
    %1593 = vmatpush1.xpose.msra.mxu0 0.0
    %1594 = vmatprep.subr.mxu0 0.0
    %1595 = vmatpush1.xpose.msra.mxu0 0.0
    %1596 = vmatprep.subr.mxu0 0.0
    %1597 = vmatpush1.xpose.msra.mxu0 0.0
    %1598 = vmatprep.subr.mxu0 0.0
    %1599 = vmatpush1.xpose.msra.mxu0 0.0
    %1600 = vmatprep.subr.mxu0 0.0
    %1601 = vmatpush1.xpose.msra.mxu0 0.0
    %1602 = vmatprep.subr.mxu0 0.0
    %1603 = vmatpush1.xpose.msra.mxu0 0.0
    %1604 = vmatprep.subr.mxu0 0.0
    %1605 = vmatpush1.xpose.msra.mxu0 0.0
    %1606 = vmatprep.mubr.f32.mxu0 %v1331
    %1607 = vmatmul.mubr.f32.gmra.mrb[0].mxu0 %v1327
    %v1608 = vpop.f32.mrb[0].mxu0
    %v1609 = vadd.f32 %v1539, %v1608
    %v1610 = vpop.f32.mrb[0].mxu0
    %1611 = vdwg.mxu0
    %v1612 = vmul.f32 %v1609, 0.11111111
    %v1613 = vmul.f32 %v1612, %v1247
    %vm1614 = vcmask 27648
    %v1615 = vsel %vm1614, %v1613, 0.0
    %v1616 = vrot.slane %v1615, 4
    %v1617 = vadd.f32 %v1615, %v1616
    %v1618 = vrot.slane %v1617, 2
    %v1619 = vadd.f32 %v1617, %v1618
    %v1620 = vrot.slane %v1619, 1
    %v1621 = vadd.f32 %v1619, %v1620
    %v1622 = vmul.f32 %v1612, %v1255
    %v1623 = vsel %vm1614, %v1622, 0.0
    %v1624 = vrot.slane %v1623, 4
    %v1625 = vadd.f32 %v1623, %v1624
    %v1626 = vrot.slane %v1625, 2
    %v1627 = vadd.f32 %v1625, %v1626
    %v1628 = vrot.slane %v1627, 1
    %v1629 = vadd.f32 %v1627, %v1628
    %v1630 = vmul.f32 %v1629, %v1252
    %vm1631 = vcmask 31744
    %v1632 = vsel %vm1631, %v1630, 0.0
    %1633 = vadd.xlane.f32.xlu0 %v1632
    %v1634 = vpop.xlane.xlu0 %1633
    %v1635 = vadd.f32 %v1634, %v1621
    %v1636 = vmul.f32 %v1629, 2.0
    %v1637 = vsub.f32 %v1635, %v1636
    %s1638 = sld [smem:[#allocation3 + $0x1]]
    %v1639 = vstv %s1638
    %vm1640 = vcmp.eq.s32.totalorder %v1242, %v1639
    %v1641 = vsel %vm1640, 1, 0
    %v1642 = vcvt.s32.f32 %v1641
    %vm1643 = vcmp.eq.s32.totalorder %v1244, %v1639
    %v1644 = vsel %vm1643, 1, 0
    %v1645 = vcvt.s32.f32 %v1644
    %v1646 = vlaneseq
    %v1647 = vshrl.u32 %v1646, 7
    %v1648 = vsub.s32 1, %v1647
    %v1649 = vrot.slane %v1240, %v1648
    %v1650 = vmul.f32 %v1105, %v1649
    %v1651 = vmul.f32 %v1106, %v1649
    %v1652 = vmul.f32 %v1107, %v1649
    %v1653 = vmul.f32 %v1108, %v1649
    %v1654 = vcombine.low %v1650, %v1652
    %v1655 = vcombine.high %v1650, %v1652
    %v1657 = vunpack.c.l.s4 1983009808
    %v1658 = vunpack.c.0.s8 %v1657
    %v1659 = vlaneseq
    %v1660 = vshrl.u32 %v1659, 7
    %v1661 = vsub.s32 %v1658, %v1660
    %v1662 = vrot.slane %v1654, %v1661
    %v1664 = vunpack.c.l.s4 1983009808
    %v1665 = vunpack.c.0.s8 %v1664
    %v1666 = vlaneseq
    %v1667 = vshrl.u32 %v1666, 7
    %v1668 = vsub.s32 %v1665, %v1667
    %v1669 = vrot.slane %v1655, %v1668
    %v1670 = vcombine.low %v1651, %v1653
    %v1671 = vcombine.high %v1651, %v1653
    %v1673 = vunpack.c.l.s4 1983009808
    %v1674 = vunpack.c.0.s8 %v1673
    %v1675 = vlaneseq
    %v1676 = vshrl.u32 %v1675, 7
    %v1677 = vsub.s32 %v1674, %v1676
    %v1678 = vrot.slane %v1670, %v1677
    %v1680 = vunpack.c.l.s4 1983009808
    %v1681 = vunpack.c.0.s8 %v1680
    %v1682 = vlaneseq
    %v1683 = vshrl.u32 %v1682, 7
    %v1684 = vsub.s32 %v1681, %v1683
    %v1685 = vrot.slane %v1671, %v1684
    %v1686 = vcombine.low %v1662, %v1678
    %v1687 = vcombine.high %v1662, %v1678
    %v1689 = vunpack.c.l.s4 1934713408
    %v1690 = vunpack.c.0.s8 %v1689
    %v1691 = vlaneseq
    %v1692 = vshrl.u32 %v1691, 7
    %v1693 = vsub.s32 %v1690, %v1692
    %v1694 = vrot.slane %v1686, %v1693
    %v1696 = vunpack.c.l.s4 1934713408
    %v1697 = vunpack.c.0.s8 %v1696
    %v1698 = vlaneseq
    %v1699 = vshrl.u32 %v1698, 7
    %v1700 = vsub.s32 %v1697, %v1699
    %v1701 = vrot.slane %v1687, %v1700
    %v1702 = vcombine.low %v1669, %v1685
    %v1703 = vcombine.high %v1669, %v1685
    %v1705 = vunpack.c.l.s4 1934713408
    %v1706 = vunpack.c.0.s8 %v1705
    %v1707 = vlaneseq
    %v1708 = vshrl.u32 %v1707, 7
    %v1709 = vsub.s32 %v1706, %v1708
    %v1710 = vrot.slane %v1702, %v1709
    %v1712 = vunpack.c.l.s4 1934713408
    %v1713 = vunpack.c.0.s8 %v1712
    %v1714 = vlaneseq
    %v1715 = vshrl.u32 %v1714, 7
    %v1716 = vsub.s32 %v1713, %v1715
    %v1717 = vrot.slane %v1703, %v1716
    %v1718 = vcombine.high %v1694, 0.0
    %v1719 = vcombine.high %v1701, 0.0
    %v1720 = vcombine.high %v1710, 0.0
    %v1721 = vcombine.high %v1717, 0.0
    %1722 = vmatprep.subr.mxu0 %v1173
    %1723 = vmatpush1.xpose.msra.mxu0 %v1149
    %1724 = vmatprep.subr.mxu0 0.0
    %1725 = vmatpush1.xpose.msra.mxu0 0.0
    %1726 = vmatprep.subr.mxu0 0.0
    %1727 = vmatpush1.xpose.msra.mxu0 0.0
    %1728 = vmatprep.subr.mxu0 0.0
    %1729 = vmatpush1.xpose.msra.mxu0 0.0
    %1730 = vmatprep.subr.mxu0 0.0
    %1731 = vmatpush1.xpose.msra.mxu0 0.0
    %1732 = vmatprep.subr.mxu0 0.0
    %1733 = vmatpush1.xpose.msra.mxu0 0.0
    %1734 = vmatprep.subr.mxu0 0.0
    %1735 = vmatpush1.xpose.msra.mxu0 0.0
    %1736 = vmatprep.subr.mxu0 0.0
    %1737 = vmatpush1.xpose.msra.mxu0 0.0
    %1738 = vmatprep.subr.mxu0 0.0
    %1739 = vmatpush1.xpose.msra.mxu0 0.0
    %1740 = vmatprep.subr.mxu0 0.0
    %1741 = vmatpush1.xpose.msra.mxu0 0.0
    %1742 = vmatprep.subr.mxu0 0.0
    %1743 = vmatpush1.xpose.msra.mxu0 0.0
    %1744 = vmatprep.subr.mxu0 0.0
    %1745 = vmatpush1.xpose.msra.mxu0 0.0
    %1746 = vmatprep.subr.mxu0 0.0
    %1747 = vmatpush1.xpose.msra.mxu0 0.0
    %1748 = vmatprep.subr.mxu0 0.0
    %1749 = vmatpush1.xpose.msra.mxu0 0.0
    %1750 = vmatprep.subr.mxu0 0.0
    %1751 = vmatpush1.xpose.msra.mxu0 0.0
    %1752 = vmatprep.subr.mxu0 0.0
    %1753 = vmatpush1.xpose.msra.mxu0 0.0
    %1754 = vmatprep.subr.mxu0 0.0
    %1755 = vmatpush1.xpose.msra.mxu0 0.0
    %1756 = vmatprep.subr.mxu0 0.0
    %1757 = vmatpush1.xpose.msra.mxu0 0.0
    %1758 = vmatprep.subr.mxu0 0.0
    %1759 = vmatpush1.xpose.msra.mxu0 0.0
    %1760 = vmatprep.subr.mxu0 0.0
    %1761 = vmatpush1.xpose.msra.mxu0 0.0
    %1762 = vmatprep.subr.mxu0 0.0
    %1763 = vmatpush1.xpose.msra.mxu0 0.0
    %1764 = vmatprep.subr.mxu0 0.0
    %1765 = vmatpush1.xpose.msra.mxu0 0.0
    %1766 = vmatprep.subr.mxu0 0.0
    %1767 = vmatpush1.xpose.msra.mxu0 0.0
    %1768 = vmatprep.subr.mxu0 0.0
    %1769 = vmatpush1.xpose.msra.mxu0 0.0
    %1770 = vmatprep.subr.mxu0 0.0
    %1771 = vmatpush1.xpose.msra.mxu0 0.0
    %1772 = vmatprep.subr.mxu0 0.0
    %1773 = vmatpush1.xpose.msra.mxu0 0.0
    %1774 = vmatprep.subr.mxu0 0.0
    %1775 = vmatpush1.xpose.msra.mxu0 0.0
    %1776 = vmatprep.subr.mxu0 0.0
    %1777 = vmatpush1.xpose.msra.mxu0 0.0
    %1778 = vmatprep.subr.mxu0 0.0
    %1779 = vmatpush1.xpose.msra.mxu0 0.0
    %1780 = vmatprep.subr.mxu0 0.0
    %1781 = vmatpush1.xpose.msra.mxu0 0.0
    %1782 = vmatprep.subr.mxu0 0.0
    %1783 = vmatpush1.xpose.msra.mxu0 0.0
    %1784 = vmatprep.subr.mxu0 0.0
    %1785 = vmatpush1.xpose.msra.mxu0 0.0
    %1786 = vmatprep.mubr.f32.mxu0 %v1718
    %1787 = vmatmul.mubr.f32.gmra.mrb[0].mxu0 %v1694
    %v1788 = vpop.f32.mrb[0].mxu0
    %v1789 = vadd.f32 0.0, %v1788
    %v1790 = vpop.f32.mrb[0].mxu0
    %1791 = vdwg.mxu0
    %1792 = vmatprep.subr.mxu0 %v1174
    %1793 = vmatpush1.xpose.msra.mxu0 %v1156
    %1794 = vmatprep.subr.mxu0 0.0
    %1795 = vmatpush1.xpose.msra.mxu0 0.0
    %1796 = vmatprep.subr.mxu0 0.0
    %1797 = vmatpush1.xpose.msra.mxu0 0.0
    %1798 = vmatprep.subr.mxu0 0.0
    %1799 = vmatpush1.xpose.msra.mxu0 0.0
    %1800 = vmatprep.subr.mxu0 0.0
    %1801 = vmatpush1.xpose.msra.mxu0 0.0
    %1802 = vmatprep.subr.mxu0 0.0
    %1803 = vmatpush1.xpose.msra.mxu0 0.0
    %1804 = vmatprep.subr.mxu0 0.0
    %1805 = vmatpush1.xpose.msra.mxu0 0.0
    %1806 = vmatprep.subr.mxu0 0.0
    %1807 = vmatpush1.xpose.msra.mxu0 0.0
    %1808 = vmatprep.subr.mxu0 0.0
    %1809 = vmatpush1.xpose.msra.mxu0 0.0
    %1810 = vmatprep.subr.mxu0 0.0
    %1811 = vmatpush1.xpose.msra.mxu0 0.0
    %1812 = vmatprep.subr.mxu0 0.0
    %1813 = vmatpush1.xpose.msra.mxu0 0.0
    %1814 = vmatprep.subr.mxu0 0.0
    %1815 = vmatpush1.xpose.msra.mxu0 0.0
    %1816 = vmatprep.subr.mxu0 0.0
    %1817 = vmatpush1.xpose.msra.mxu0 0.0
    %1818 = vmatprep.subr.mxu0 0.0
    %1819 = vmatpush1.xpose.msra.mxu0 0.0
    %1820 = vmatprep.subr.mxu0 0.0
    %1821 = vmatpush1.xpose.msra.mxu0 0.0
    %1822 = vmatprep.subr.mxu0 0.0
    %1823 = vmatpush1.xpose.msra.mxu0 0.0
    %1824 = vmatprep.subr.mxu0 0.0
    %1825 = vmatpush1.xpose.msra.mxu0 0.0
    %1826 = vmatprep.subr.mxu0 0.0
    %1827 = vmatpush1.xpose.msra.mxu0 0.0
    %1828 = vmatprep.subr.mxu0 0.0
    %1829 = vmatpush1.xpose.msra.mxu0 0.0
    %1830 = vmatprep.subr.mxu0 0.0
    %1831 = vmatpush1.xpose.msra.mxu0 0.0
    %1832 = vmatprep.subr.mxu0 0.0
    %1833 = vmatpush1.xpose.msra.mxu0 0.0
    %1834 = vmatprep.subr.mxu0 0.0
    %1835 = vmatpush1.xpose.msra.mxu0 0.0
    %1836 = vmatprep.subr.mxu0 0.0
    %1837 = vmatpush1.xpose.msra.mxu0 0.0
    %1838 = vmatprep.subr.mxu0 0.0
    %1839 = vmatpush1.xpose.msra.mxu0 0.0
    %1840 = vmatprep.subr.mxu0 0.0
    %1841 = vmatpush1.xpose.msra.mxu0 0.0
    %1842 = vmatprep.subr.mxu0 0.0
    %1843 = vmatpush1.xpose.msra.mxu0 0.0
    %1844 = vmatprep.subr.mxu0 0.0
    %1845 = vmatpush1.xpose.msra.mxu0 0.0
    %1846 = vmatprep.subr.mxu0 0.0
    %1847 = vmatpush1.xpose.msra.mxu0 0.0
    %1848 = vmatprep.subr.mxu0 0.0
    %1849 = vmatpush1.xpose.msra.mxu0 0.0
    %1850 = vmatprep.subr.mxu0 0.0
    %1851 = vmatpush1.xpose.msra.mxu0 0.0
    %1852 = vmatprep.subr.mxu0 0.0
    %1853 = vmatpush1.xpose.msra.mxu0 0.0
    %1854 = vmatprep.subr.mxu0 0.0
    %1855 = vmatpush1.xpose.msra.mxu0 0.0
    %1856 = vmatprep.mubr.f32.mxu0 %v1719
    %1857 = vmatmul.mubr.f32.gmra.mrb[0].mxu0 %v1701
    %v1858 = vpop.f32.mrb[0].mxu0
    %v1859 = vadd.f32 %v1789, %v1858
    %v1860 = vpop.f32.mrb[0].mxu0
    %1861 = vdwg.mxu0
    %1862 = vmatprep.subr.mxu0 %v1175
    %1863 = vmatpush1.xpose.msra.mxu0 %v1165
    %1864 = vmatprep.subr.mxu0 0.0
    %1865 = vmatpush1.xpose.msra.mxu0 0.0
    %1866 = vmatprep.subr.mxu0 0.0
    %1867 = vmatpush1.xpose.msra.mxu0 0.0
    %1868 = vmatprep.subr.mxu0 0.0
    %1869 = vmatpush1.xpose.msra.mxu0 0.0
    %1870 = vmatprep.subr.mxu0 0.0
    %1871 = vmatpush1.xpose.msra.mxu0 0.0
    %1872 = vmatprep.subr.mxu0 0.0
    %1873 = vmatpush1.xpose.msra.mxu0 0.0
    %1874 = vmatprep.subr.mxu0 0.0
    %1875 = vmatpush1.xpose.msra.mxu0 0.0
    %1876 = vmatprep.subr.mxu0 0.0
    %1877 = vmatpush1.xpose.msra.mxu0 0.0
    %1878 = vmatprep.subr.mxu0 0.0
    %1879 = vmatpush1.xpose.msra.mxu0 0.0
    %1880 = vmatprep.subr.mxu0 0.0
    %1881 = vmatpush1.xpose.msra.mxu0 0.0
    %1882 = vmatprep.subr.mxu0 0.0
    %1883 = vmatpush1.xpose.msra.mxu0 0.0
    %1884 = vmatprep.subr.mxu0 0.0
    %1885 = vmatpush1.xpose.msra.mxu0 0.0
    %1886 = vmatprep.subr.mxu0 0.0
    %1887 = vmatpush1.xpose.msra.mxu0 0.0
    %1888 = vmatprep.subr.mxu0 0.0
    %1889 = vmatpush1.xpose.msra.mxu0 0.0
    %1890 = vmatprep.subr.mxu0 0.0
    %1891 = vmatpush1.xpose.msra.mxu0 0.0
    %1892 = vmatprep.subr.mxu0 0.0
    %1893 = vmatpush1.xpose.msra.mxu0 0.0
    %1894 = vmatprep.subr.mxu0 0.0
    %1895 = vmatpush1.xpose.msra.mxu0 0.0
    %1896 = vmatprep.subr.mxu0 0.0
    %1897 = vmatpush1.xpose.msra.mxu0 0.0
    %1898 = vmatprep.subr.mxu0 0.0
    %1899 = vmatpush1.xpose.msra.mxu0 0.0
    %1900 = vmatprep.subr.mxu0 0.0
    %1901 = vmatpush1.xpose.msra.mxu0 0.0
    %1902 = vmatprep.subr.mxu0 0.0
    %1903 = vmatpush1.xpose.msra.mxu0 0.0
    %1904 = vmatprep.subr.mxu0 0.0
    %1905 = vmatpush1.xpose.msra.mxu0 0.0
    %1906 = vmatprep.subr.mxu0 0.0
    %1907 = vmatpush1.xpose.msra.mxu0 0.0
    %1908 = vmatprep.subr.mxu0 0.0
    %1909 = vmatpush1.xpose.msra.mxu0 0.0
    %1910 = vmatprep.subr.mxu0 0.0
    %1911 = vmatpush1.xpose.msra.mxu0 0.0
    %1912 = vmatprep.subr.mxu0 0.0
    %1913 = vmatpush1.xpose.msra.mxu0 0.0
    %1914 = vmatprep.subr.mxu0 0.0
    %1915 = vmatpush1.xpose.msra.mxu0 0.0
    %1916 = vmatprep.subr.mxu0 0.0
    %1917 = vmatpush1.xpose.msra.mxu0 0.0
    %1918 = vmatprep.subr.mxu0 0.0
    %1919 = vmatpush1.xpose.msra.mxu0 0.0
    %1920 = vmatprep.subr.mxu0 0.0
    %1921 = vmatpush1.xpose.msra.mxu0 0.0
    %1922 = vmatprep.subr.mxu0 0.0
    %1923 = vmatpush1.xpose.msra.mxu0 0.0
    %1924 = vmatprep.subr.mxu0 0.0
    %1925 = vmatpush1.xpose.msra.mxu0 0.0
    %1926 = vmatprep.mubr.f32.mxu0 %v1720
    %1927 = vmatmul.mubr.f32.gmra.mrb[0].mxu0 %v1710
    %v1928 = vpop.f32.mrb[0].mxu0
    %v1929 = vadd.f32 %v1859, %v1928
    %v1930 = vpop.f32.mrb[0].mxu0
    %1931 = vdwg.mxu0
    %1932 = vmatprep.subr.mxu0 %v1176
    %1933 = vmatpush1.xpose.msra.mxu0 %v1172
    %1934 = vmatprep.subr.mxu0 0.0
    %1935 = vmatpush1.xpose.msra.mxu0 0.0
    %1936 = vmatprep.subr.mxu0 0.0
    %1937 = vmatpush1.xpose.msra.mxu0 0.0
    %1938 = vmatprep.subr.mxu0 0.0
    %1939 = vmatpush1.xpose.msra.mxu0 0.0
    %1940 = vmatprep.subr.mxu0 0.0
    %1941 = vmatpush1.xpose.msra.mxu0 0.0
    %1942 = vmatprep.subr.mxu0 0.0
    %1943 = vmatpush1.xpose.msra.mxu0 0.0
    %1944 = vmatprep.subr.mxu0 0.0
    %1945 = vmatpush1.xpose.msra.mxu0 0.0
    %1946 = vmatprep.subr.mxu0 0.0
    %1947 = vmatpush1.xpose.msra.mxu0 0.0
    %1948 = vmatprep.subr.mxu0 0.0
    %1949 = vmatpush1.xpose.msra.mxu0 0.0
    %1950 = vmatprep.subr.mxu0 0.0
    %1951 = vmatpush1.xpose.msra.mxu0 0.0
    %1952 = vmatprep.subr.mxu0 0.0
    %1953 = vmatpush1.xpose.msra.mxu0 0.0
    %1954 = vmatprep.subr.mxu0 0.0
    %1955 = vmatpush1.xpose.msra.mxu0 0.0
    %1956 = vmatprep.subr.mxu0 0.0
    %1957 = vmatpush1.xpose.msra.mxu0 0.0
    %1958 = vmatprep.subr.mxu0 0.0
    %1959 = vmatpush1.xpose.msra.mxu0 0.0
    %1960 = vmatprep.subr.mxu0 0.0
    %1961 = vmatpush1.xpose.msra.mxu0 0.0
    %1962 = vmatprep.subr.mxu0 0.0
    %1963 = vmatpush1.xpose.msra.mxu0 0.0
    %1964 = vmatprep.subr.mxu0 0.0
    %1965 = vmatpush1.xpose.msra.mxu0 0.0
    %1966 = vmatprep.subr.mxu0 0.0
    %1967 = vmatpush1.xpose.msra.mxu0 0.0
    %1968 = vmatprep.subr.mxu0 0.0
    %1969 = vmatpush1.xpose.msra.mxu0 0.0
    %1970 = vmatprep.subr.mxu0 0.0
    %1971 = vmatpush1.xpose.msra.mxu0 0.0
    %1972 = vmatprep.subr.mxu0 0.0
    %1973 = vmatpush1.xpose.msra.mxu0 0.0
    %1974 = vmatprep.subr.mxu0 0.0
    %1975 = vmatpush1.xpose.msra.mxu0 0.0
    %1976 = vmatprep.subr.mxu0 0.0
    %1977 = vmatpush1.xpose.msra.mxu0 0.0
    %1978 = vmatprep.subr.mxu0 0.0
    %1979 = vmatpush1.xpose.msra.mxu0 0.0
    %1980 = vmatprep.subr.mxu0 0.0
    %1981 = vmatpush1.xpose.msra.mxu0 0.0
    %1982 = vmatprep.subr.mxu0 0.0
    %1983 = vmatpush1.xpose.msra.mxu0 0.0
    %1984 = vmatprep.subr.mxu0 0.0
    %1985 = vmatpush1.xpose.msra.mxu0 0.0
    %1986 = vmatprep.subr.mxu0 0.0
    %1987 = vmatpush1.xpose.msra.mxu0 0.0
    %1988 = vmatprep.subr.mxu0 0.0
    %1989 = vmatpush1.xpose.msra.mxu0 0.0
    %1990 = vmatprep.subr.mxu0 0.0
    %1991 = vmatpush1.xpose.msra.mxu0 0.0
    %1992 = vmatprep.subr.mxu0 0.0
    %1993 = vmatpush1.xpose.msra.mxu0 0.0
    %1994 = vmatprep.subr.mxu0 0.0
    %1995 = vmatpush1.xpose.msra.mxu0 0.0
    %1996 = vmatprep.mubr.f32.mxu0 %v1721
    %1997 = vmatmul.mubr.f32.gmra.mrb[0].mxu0 %v1717
    %v1998 = vpop.f32.mrb[0].mxu0
    %v1999 = vadd.f32 %v1929, %v1998
    %v2000 = vpop.f32.mrb[0].mxu0
    %2001 = vdwg.mxu0
    %v2002 = vmul.f32 %v1999, 0.11111111
    %v2003 = vmul.f32 %v2002, %v1247
    %v2004 = vsel %vm1614, %v2003, 0.0
    %v2005 = vrot.slane %v2004, 4
    %v2006 = vadd.f32 %v2004, %v2005
    %v2007 = vrot.slane %v2006, 2
    %v2008 = vadd.f32 %v2006, %v2007
    %v2009 = vrot.slane %v2008, 1
    %v2010 = vadd.f32 %v2008, %v2009
    %v2011 = vmul.f32 %v2002, %v1645
    %v2012 = vsel %vm1614, %v2011, 0.0
    %v2013 = vrot.slane %v2012, 4
    %v2014 = vadd.f32 %v2012, %v2013
    %v2015 = vrot.slane %v2014, 2
    %v2016 = vadd.f32 %v2014, %v2015
    %v2017 = vrot.slane %v2016, 1
    %v2018 = vadd.f32 %v2016, %v2017
    %v2019 = vmul.f32 %v2018, %v1642
    %v2020 = vsel %vm1631, %v2019, 0.0
    %2021 = vadd.xlane.f32.xlu0 %v2020
    %v2022 = vpop.xlane.xlu0 %2021
    %v2023 = vadd.f32 %v2022, %v2010
    %v2024 = vmul.f32 %v2018, 2.0
    %v2025 = vsub.f32 %v2023, %v2024
    %vm2026 = vcmask 1040384
    %v2027 = vsel %vm2026, %v1637, %v2025
    %v2028 = vsel %vm2026, %v1252, %v1642
    %s2029 = smul.f32 %s98, 0.5
    %s2030 = smul.f32 %s2029, %s98
    %v2031 = vstv %s2030
    %v2032 = vmul.f32 %v2031, %v2027
    %v2033 = vadd.f32 %v1239, %v2032
    %vm2034 = vcmask 25600
    %v2035 = vsel %vm2034, %v2033, -inf
    %2036 = vmax.xlane.f32.xlu0 %v2035
    %v2037 = vpop.xlane.xlu0 %2036
    %v2038 = vsub.f32 %v2033, %v2037
    %v2039 = vmul.f32 %v2038, 1.442695
    %v2040 = vpow.pop %v2039
    %v2041 = vsel %vm2034, %v2040, 0.0
    %2042 = vadd.xlane.f32.xlu0 %v2041
    %v2043 = vpop.xlane.xlu0 %2042
    %v2044 = vlog2.pop %v2043
    %v2045 = vmul.f32 %v2044, 0.6931472
    %v2046 = vadd.f32 %v2037, %v2045
    %v2047 = vmul.f32 %v2028, %v2033
    %v2048 = vsel %vm2034, %v2047, 0.0
    %2049 = vadd.xlane.f32.xlu0 %v2048
    %v2050 = vpop.xlane.xlu0 %2049
    %v2051 = vsub.f32 %v2046, %v2050
    %v2052 = vsel %vm831, %v2051, 0.0
    %v2053 = vrot.slane %v2052, 4
    %v2054 = vadd.f32 %v2052, %v2053
    %v2055 = vrot.slane %v2054, 2
    %v2056 = vadd.f32 %v2054, %v2055
    %v2057 = vrot.slane %v2056, 1
    %v2058 = vadd.f32 %v2056, %v2057
    %v2059 = vmul.f32 %v2058, 0.5
    %2060 = vmatprep.subr.mxu0 0.0
    %2061 = vmatpush1.xpose.msra.mxu0 %v1075
    %2062 = vmatprep.subr.mxu0 0.0
    %2063 = vmatpush1.xpose.msra.mxu0 0.0
    %2064 = vmatprep.subr.mxu0 0.0
    %2065 = vmatpush1.xpose.msra.mxu0 0.0
    %2066 = vmatprep.subr.mxu0 0.0
    %2067 = vmatpush1.xpose.msra.mxu0 0.0
    %2068 = vmatprep.subr.mxu0 0.0
    %2069 = vmatpush1.xpose.msra.mxu0 0.0
    %2070 = vmatprep.subr.mxu0 0.0
    %2071 = vmatpush1.xpose.msra.mxu0 0.0
    %2072 = vmatprep.subr.mxu0 0.0
    %2073 = vmatpush1.xpose.msra.mxu0 0.0
    %2074 = vmatprep.subr.mxu0 0.0
    %2075 = vmatpush1.xpose.msra.mxu0 0.0
    %2076 = vmatprep.subr.mxu0 0.0
    %2077 = vmatpush1.xpose.msra.mxu0 0.0
    %2078 = vmatprep.subr.mxu0 0.0
    %2079 = vmatpush1.xpose.msra.mxu0 0.0
    %2080 = vmatprep.subr.mxu0 0.0
    %2081 = vmatpush1.xpose.msra.mxu0 0.0
    %2082 = vmatprep.subr.mxu0 0.0
    %2083 = vmatpush1.xpose.msra.mxu0 0.0
    %2084 = vmatprep.subr.mxu0 0.0
    %2085 = vmatpush1.xpose.msra.mxu0 0.0
    %2086 = vmatprep.subr.mxu0 0.0
    %2087 = vmatpush1.xpose.msra.mxu0 0.0
    %2088 = vmatprep.subr.mxu0 0.0
    %2089 = vmatpush1.xpose.msra.mxu0 0.0
    %2090 = vmatprep.subr.mxu0 0.0
    %2091 = vmatpush1.xpose.msra.mxu0 0.0
    %2092 = vmatprep.subr.mxu0 0.0
    %2093 = vmatpush1.xpose.msra.mxu0 0.0
    %2094 = vmatprep.subr.mxu0 0.0
    %2095 = vmatpush1.xpose.msra.mxu0 0.0
    %2096 = vmatprep.subr.mxu0 0.0
    %2097 = vmatpush1.xpose.msra.mxu0 0.0
    %2098 = vmatprep.subr.mxu0 0.0
    %2099 = vmatpush1.xpose.msra.mxu0 0.0
    %2100 = vmatprep.subr.mxu0 0.0
    %2101 = vmatpush1.xpose.msra.mxu0 0.0
    %2102 = vmatprep.subr.mxu0 0.0
    %2103 = vmatpush1.xpose.msra.mxu0 0.0
    %2104 = vmatprep.subr.mxu0 0.0
    %2105 = vmatpush1.xpose.msra.mxu0 0.0
    %2106 = vmatprep.subr.mxu0 0.0
    %2107 = vmatpush1.xpose.msra.mxu0 0.0
    %2108 = vmatprep.subr.mxu0 0.0
    %2109 = vmatpush1.xpose.msra.mxu0 0.0
    %2110 = vmatprep.subr.mxu0 0.0
    %2111 = vmatpush1.xpose.msra.mxu0 0.0
    %2112 = vmatprep.subr.mxu0 0.0
    %2113 = vmatpush1.xpose.msra.mxu0 0.0
    %2114 = vmatprep.subr.mxu0 0.0
    %2115 = vmatpush1.xpose.msra.mxu0 0.0
    %2116 = vmatprep.subr.mxu0 0.0
    %2117 = vmatpush1.xpose.msra.mxu0 0.0
    %2118 = vmatprep.subr.mxu0 0.0
    %2119 = vmatpush1.xpose.msra.mxu0 0.0
    %2120 = vmatprep.subr.mxu0 0.0
    %2121 = vmatpush1.xpose.msra.mxu0 0.0
    %2122 = vmatprep.subr.mxu0 0.0
    %2123 = vmatpush1.xpose.msra.mxu0 0.0
    %2124 = vmatprep.mubr.f32.mxu0 0.0
    %2125 = vmatmul.mubr.f32.gmra.mrb[0].mxu0 %v1075
    %v2126 = vpop.f32.mrb[0].mxu0
    %v2127 = vadd.f32 0.0, %v2126
    %v2128 = vpop.f32.mrb[0].mxu0
    %2129 = vdwg.mxu0
    %vm2130 = vcmp.ne.s32.totalorder %v1244, %v1242
    %v2131 = vsel %vm2130, 1, 0
    %v2132 = vcvt.s32.f32 %v2131
    %v2133 = vand.u32 2147483647, %v2127
    %v2134 = vmul.f32 %v2133, %v2132
    %vm2135 = vcmask 64512
    %v2136 = vsel %vm2135, %v2134, 0.0
    %2137 = vadd.xlane.f32.xlu0 %v2136
    %v2138 = vpop.xlane.xlu0 %2137
    %v2139 = vrot.slane %v2138, 4
    %v2140 = vadd.f32 %v2138, %v2139
    %v2141 = vrot.slane %v2140, 2
    %v2142 = vadd.f32 %v2140, %v2141
    %v2143 = vrot.slane %v2142, 1
    %v2144 = vadd.f32 %v2142, %v2143
    %v2145 = vmul.f32 %v2144, 0.017857144
    %v2146 = vmul.f32 %v2145, 0.1
    %v2147 = vadd.f32 %v2059, %v2146
    %vm2148 = vcmask 0
    %2149 = vst.msk [vmem:[#allocation13] sm:$0x1] %vm2148, %v2147
    // Predicated region
    $region54: #{tpu_custom_call.1} parent=1 // pred_check
      _
    $region55: #{tpu_custom_call.1} parent=1 // pred_check_branch
      %2151 = sbr.rel (0) target = $region57
    $region56: #{tpu_custom_call.1} parent=1 // pred_region
      %s2153 = ssub.s32 16, 16
      %2154 = vsyncadd [#allocation5], %s2153
      %s2156 = sshll.u32 [#allocation13], 4
      %s2157 = int_to_ptr.vmem [resolvable:$true] %s2156
      %2159 = dma.vmem_to_hbm [thread:$0]  %s2157, 16, %s8, [#allocation5]
    $region57: #{tpu_custom_call.1} parent=1 // pred_fallthru
      _
    // Predicated region
    $region58: #{tpu_custom_call.1} parent=1 // pred_check
      _
    $region59: #{tpu_custom_call.1} parent=1 // pred_check_branch
      %2161 = sbr.rel (0) target = $region61
    $region60: #{tpu_custom_call.1} parent=1 // pred_region
      %2162 = dma.done [#allocation5], 16
    $region61: #{tpu_custom_call.1} parent=1 // pred_fallthru
      _
    %2163 = vsyncpa [#allocation4], 1
    %2164 = vsyncpa [#allocation9], 1
    %2165 = vsyncpa [#allocation12], 1
    %2166 = vsyncpa [#allocation5], 1
    %2167 = vsyncpa [#allocation6], 1

</llo_original>
